<compile_context>
chip_gen: v6e
topology: v6e:2x2x1
jax: 0.10.0
libtpu: 0.0.40
codegen_flags: <defaults>
</compile_context>

<pallas_src>
import functools

import jax
import jax.numpy as jnp
from jax import lax
from jax.experimental import pallas as pl
from jax.experimental.pallas import tpu as pltpu


def harddarkrank_kernel(student_ref, teacher_ref, sq_s_ref, sq_t_ref, nlp_ref, *,
                        alpha, beta, permute_len, tm, eps=1e-12):
    n = student_ref.shape[0]
    row_base = pl.multiple_of(pl.program_id(0) * tm, tm)

    s_full = student_ref[...]                      # (N, D), resident in VMEM
    t_full = teacher_ref[...]
    s_tile = student_ref[pl.ds(row_base, tm), :]   # (TM, D) stripe (VMEM read, no DMA)
    t_tile = teacher_ref[pl.ds(row_base, tm), :]

    # Gram stripes, (N, TM).  Resident array is the canonical (M, K) MXU LHS;
    # only the small (TM, D) stripe is the contracted-on-dim-1 RHS (q@k.T form).
    dot_dims = (((1,), (1,)), ((), ()))
    prod_s = lax.dot_general(s_full, s_tile, dot_dims,
                             preferred_element_type=jnp.float32)    # (N, TM)
    prod_t = lax.dot_general(t_full, t_tile, dot_dims,
                             preferred_element_type=jnp.float32)    # (N, TM)

    # Diagonal mask of this stripe: global row j == row_base + lane r.
    row_j = lax.broadcasted_iota(jnp.int32, (n, tm), 0)
    col_r = lax.broadcasted_iota(jnp.int32, (n, tm), 1)
    is_diag = row_j == col_r + row_base

    # Student squared distances need this stripe's row norms as a (1, TM) lane
    # vector.  Extract them as the diagonal of prod_s (s_i . s_i): one cheap
    # sublane reduce, no (TM,1)->(1,TM) transpose, values consistent with prod_s.
    sq_s_full = sq_s_ref[...]                                        # (N, 1)
    sq_s_tile = jnp.sum(jnp.where(is_diag, prod_s, 0.0),
                        axis=0, keepdims=True)                       # (1, TM)

    d2 = jnp.maximum(sq_s_full + sq_s_tile - 2.0 * prod_s, eps)      # (N, TM)
    d = jnp.sqrt(d2)
    if beta == 3:
        dp = d2 * d                      # 2 VPU multiplies, nothing on the EUP
    elif float(beta).is_integer():
        dp = d ** int(beta)              # lax.integer_pow -> multiplies
    else:
        dp = d ** float(beta)            # generic path (EUP exp/log)
    score_s = (-float(alpha)) * dp                                   # (N, TM)

    # Teacher ranking key: top-k on -d2 (strictly monotone in the true score
    # for alpha, beta > 0).  The per-column constant ||t_r||^2 is dropped, so
    # no sqrt / pow / scale is spent on the teacher at all.
    neg_inf = jnp.float32(-jnp.inf)
    key_t = 2.0 * prod_t - sq_t_ref[...]                             # (N, TM)
    key_t = jnp.where(is_diag, neg_inf, key_t)   # exclude self-match (torch [1:k+1])

    # Iterative top-k: per selected index one column-max + one one-hot gather,
    # both reducing over the sublane axis.
    # NOTE: exact teacher-score ties sum all tied student scores into a single
    # slot (differs from torch argsort; measure-zero for continuous inputs).
    ordered = []
    for _ in range(permute_len):
        col_max = jnp.max(key_t, axis=0, keepdims=True)              # (1, TM)
        onehot = key_t == col_max
        ordered.append(jnp.sum(jnp.where(onehot, score_s, 0.0),
                               axis=0, keepdims=True))               # (1, TM)
        key_t = jnp.where(onehot, neg_inf, key_t)
    # TODO(synk): switch the two unrolled loops to lax.fori_loop over a
    # (permute_len, TM) buffer if permute_len is ever raised beyond ~8.

    # log_prob = sum_i ( ordered[i] - logsumexp(ordered[i:]) ), computed
    # back-to-front with a running (max, sumexp); the last term is exactly 0.
    m = ordered[-1]
    s = jnp.ones_like(m)
    log_prob = jnp.zeros_like(m)
    for i in range(permute_len - 2, -1, -1):
        o = ordered[i]
        new_m = jnp.maximum(m, o)
        s = s * jnp.exp(m - new_m) + jnp.exp(o - new_m)
        m = new_m
        log_prob = log_prob + (o - (m + jnp.log(s)))

    # Lane-dense store: replicate the (1, TM) row across 8 sublanes so the
    # output block is a full (8, TM) tile (unmasked vst, wide writeback DMA).
    nlp_ref[...] = jnp.broadcast_to(-log_prob, (8, tm))


def _pick_tm(n):
    # Review guidance: TM=128 usually balances vreg/VMEM spill pressure in the
    # unrolled top-k against the ~0.35us per-grid-step overhead (sweep
    # {64, 128, 256} per generation; lean toward 64-128 on v5e).
    for tm in (128, 256, 64, 32, 16, 8):
        if tm <= n and n % tm == 0:
            return tm
    return n


def _vmem_limit_bytes(n, d, tm, dtype):
    """Size the Mosaic VMEM limit from the actual buffers, capped below physical."""
    item = jnp.dtype(dtype).itemsize
    resident = 2 * n * d * item          # student + teacher, single-buffered
    norms = 2 * 2 * n * 4                # two (N, 1) f32 residents (x2 buffers)
    live = 12 * n * tm * 4               # live (N, TM) f32 intermediates (generous)
    out = 2 * 8 * tm * 4                 # (8, TM) output block, double-buffered
    need = int((resident + norms + live + out) * 1.25) + (4 << 20)
    try:
        phys = int(pltpu.get_tpu_info().vmem_capacity_bytes)
    except Exception:
        phys = 64 << 20                  # conservative fallback: v7x per-core VMEM
    return max(16 << 20, min(need, int(phys * 0.85)))


def hard_dark_rank(student, teacher, *, alpha=3, beta=3, permute_len=4, tm=None):
    n, d = student.shape
    assert teacher.shape == (n, d)
    assert 1 <= permute_len < n, "permute_len must be < batch size"
    # The -d2 teacher ranking key is order-equivalent only for alpha, beta > 0.
    assert alpha > 0 and beta > 0, "HardDarkRank kernel requires alpha > 0, beta > 0"
    if tm is None:
        tm = _pick_tm(n)
    assert n % tm == 0 and (tm == n or tm % 8 == 0), (n, tm)
    num_tiles = n // tm

    # Precompute squared row norms once (f32) instead of per grid step.
    sq_s = jnp.sum(student.astype(jnp.float32) ** 2, axis=1, keepdims=True)  # (N, 1)
    sq_t = jnp.sum(teacher.astype(jnp.float32) ** 2, axis=1, keepdims=True)  # (N, 1)

    kernel = functools.partial(
        harddarkrank_kernel, alpha=alpha, beta=beta,
        permute_len=permute_len, tm=tm)
    vmem_limit = _vmem_limit_bytes(n, d, tm, student.dtype)

    def run(single_buffer_resident):
        kw = ({"pipeline_mode": pl.Buffered(1)} if single_buffer_resident else {})

        def resident(shape):
            # Constant index_map: DMA'd once, stays in VMEM; nothing to pipeline.
            return pl.BlockSpec(shape, lambda i: (0, 0), **kw)

        return pl.pallas_call(
            kernel,
            out_shape=jax.ShapeDtypeStruct((num_tiles * 8, tm), jnp.float32),
            grid_spec=pl.GridSpec(
                grid=(num_tiles,),
                in_specs=[
                    resident((n, d)),        # student (resident)
                    resident((n, d)),        # teacher (resident)
                    resident((n, 1)),        # ||s_j||^2
                    resident((n, 1)),        # ||t_j||^2
                ],
                out_specs=pl.BlockSpec((8, tm), lambda i: (i, 0)),
            ),
            compiler_params=pltpu.CompilerParams(
                dimension_semantics=("parallel",),   # use both TCs on v7x
                vmem_limit_bytes=vmem_limit,
            ),
        )(student, teacher, sq_s, sq_t)

    try:
        per_row = jax.block_until_ready(run(single_buffer_resident=True))
    except Exception:
        # Older Pallas without pl.Buffered / buffer_count=1: fall back to the
        # default double-buffered resident inputs.
        per_row = run(single_buffer_resident=False)

    # Every per-row NLP is replicated exactly 8x (lane-dense store), so the
    # plain mean over the replicated array equals the per-row mean.
    return jnp.mean(per_row)


def _reference(student, teacher, *, alpha=3, beta=3, permute_len=4, eps=1e-12):
    """Pure-JAX replica of the PyTorch forward (for verification)."""
    def pdist(e):
        sq = jnp.sum(e * e, axis=1)
        d2 = jnp.maximum(sq[:, None] + sq[None, :] - 2.0 * (e @ e.T), eps)
        d = jnp.sqrt(d2)
        return d * (1.0 - jnp.eye(e.shape[0], dtype=d.dtype))

    score_t = -alpha * pdist(teacher) ** beta
    score_s = -alpha * pdist(student) ** beta
    permute_idx = jnp.argsort(-score_t, axis=1)[:, 1:permute_len + 1]
    ordered = jnp.take_along_axis(score_s, permute_idx, axis=1)
    lses = jnp.stack(
        [jax.nn.logsumexp(ordered[:, i:], axis=1) for i in range(permute_len)],
        axis=1)
    log_prob = (ordered - lses).sum(axis=1)
    return (-log_prob).mean()


if __name__ == "__main__":
    N, D = 64, 32          # 64 embeddings of dim 32
    key = jax.random.PRNGKey(0)
    ks, kt = jax.random.split(key)
    student = jax.random.normal(ks, (N, D), dtype=jnp.float32)
    teacher = jax.random.normal(kt, (N, D), dtype=jnp.float32)

    # single row-stripe (TM = N) and a multi-tile run (exercises the grid path)
    loss = jax.block_until_ready(
        hard_dark_rank(student, teacher, alpha=3, beta=3, permute_len=4))
    loss_tiled = jax.block_until_ready(
        hard_dark_rank(student, teacher, alpha=3, beta=3, permute_len=4, tm=16))

    ref = _reference(student, teacher, alpha=3, beta=3, permute_len=4)
    assert jnp.allclose(loss, ref, rtol=1e-4, atol=1e-4), (loss, ref)
    assert jnp.allclose(loss_tiled, ref, rtol=1e-4, atol=1e-4), (loss_tiled, ref)

    print("KERNEL_OK")
</pallas_src>

<mosaic_0001>
module attributes {stable_mosaic.version = 11 : i64} {
  func.func @harddarkrank_kernel(%arg0: i32, %arg1: memref<64x32xf32, #tpu.memory_space<vmem>>, %arg2: memref<64x32xf32, #tpu.memory_space<vmem>>, %arg3: memref<64x1xf32, #tpu.memory_space<vmem>>, %arg4: memref<64x1xf32, #tpu.memory_space<vmem>>, %arg5: memref<8x64xf32, #tpu.memory_space<vmem>>) attributes {dimension_semantics = [#tpu.dimension_semantics<parallel>], iteration_bounds = array<i64: 1>, scalar_prefetch = 0 : i64, scratch_operands = 0 : i64, tpu.core_type = #tpu.core_type<tc>, window_params = [{pipeline_mode = #tpu.pipeline_mode<synchronous>, transform_indices = @transform_0, window_bounds = array<i64: 64, 32>}, {pipeline_mode = #tpu.pipeline_mode<synchronous>, transform_indices = @transform_1, window_bounds = array<i64: 64, 32>}, {pipeline_mode = #tpu.pipeline_mode<synchronous>, transform_indices = @transform_2, window_bounds = array<i64: 64, 1>}, {pipeline_mode = #tpu.pipeline_mode<synchronous>, transform_indices = @transform_3, window_bounds = array<i64: 64, 1>}, {transform_indices = @transform_4, window_bounds = array<i64: 8, 64>}]} {
    %c64_i32 = arith.constant 64 : i32
    %0 = arith.muli %arg0, %c64_i32 : i32
    %1 = tpu.assume_multiple %0, 64 : i32
    %c0 = arith.constant 0 : index
    %c0_0 = arith.constant 0 : index
    %2 = vector.load %arg1[%c0, %c0_0] : memref<64x32xf32, #tpu.memory_space<vmem>>, vector<64x32xf32>
    %c0_1 = arith.constant 0 : index
    %c0_2 = arith.constant 0 : index
    %3 = vector.load %arg2[%c0_1, %c0_2] : memref<64x32xf32, #tpu.memory_space<vmem>>, vector<64x32xf32>
    %4 = arith.index_cast %1 : i32 to index
    %c0_3 = arith.constant 0 : index
    %5 = vector.load %arg1[%4, %c0_3] : memref<64x32xf32, #tpu.memory_space<vmem>>, vector<64x32xf32>
    %6 = arith.index_cast %1 : i32 to index
    %c0_4 = arith.constant 0 : index
    %7 = vector.load %arg2[%6, %c0_4] : memref<64x32xf32, #tpu.memory_space<vmem>>, vector<64x32xf32>
    %cst = arith.constant dense<0.000000e+00> : vector<64x64xf32>
    %8 = tpu.matmul %2, %5, %cst {dimension_numbers = #tpu.dot_dimension_numbers<[1], [1], [0], [0], [0, 0, 1, 0], [], []>} : vector<64x32xf32>, vector<64x32xf32>, vector<64x64xf32> -> vector<64x64xf32>
    %cst_5 = arith.constant dense<0.000000e+00> : vector<64x64xf32>
    %9 = tpu.matmul %3, %7, %cst_5 {dimension_numbers = #tpu.dot_dimension_numbers<[1], [1], [0], [0], [0, 0, 1, 0], [], []>} : vector<64x32xf32>, vector<64x32xf32>, vector<64x64xf32> -> vector<64x64xf32>
    %10 = tpu.iota {dimensions = array<i32: 0>} : vector<64x64xi32>
    %11 = tpu.iota {dimensions = array<i32: 1>} : vector<64x64xi32>
    %12 = vector.broadcast %1 : i32 to vector<64x64xi32>
    %13 = arith.addi %11, %12 : vector<64x64xi32>
    %14 = arith.cmpi eq, %10, %13 : vector<64x64xi32>
    %c0_6 = arith.constant 0 : index
    %c0_7 = arith.constant 0 : index
    %15 = vector.load %arg3[%c0_6, %c0_7] : memref<64x1xf32, #tpu.memory_space<vmem>>, vector<64x1xf32>
    %cst_8 = arith.constant 0.000000e+00 : f32
    %16 = vector.broadcast %cst_8 : f32 to vector<64x64xf32>
    %17 = arith.select %14, %8, %16 : vector<64x64xi1>, vector<64x64xf32>
    %cst_9 = arith.constant dense<0.000000e+00> : vector<64xf32>
    %18 = vector.multi_reduction <add>, %17, %cst_9 [0] : vector<64x64xf32> to vector<64xf32>
    %19 = vector.shape_cast %18 : vector<64xf32> to vector<1x64xf32>
    %20 = vector.broadcast %15 : vector<64x1xf32> to vector<64x64xf32>
    %21 = vector.broadcast %19 : vector<1x64xf32> to vector<64x64xf32>
    %22 = arith.addf %20, %21 : vector<64x64xf32>
    %cst_10 = arith.constant 2.000000e+00 : f32
    %23 = vector.broadcast %cst_10 : f32 to vector<64x64xf32>
    %24 = arith.mulf %23, %8 : vector<64x64xf32>
    %25 = arith.subf %22, %24 : vector<64x64xf32>
    %cst_11 = arith.constant 9.99999996E-13 : f32
    %26 = vector.broadcast %cst_11 : f32 to vector<64x64xf32>
    %27 = arith.maximumf %25, %26 : vector<64x64xf32>
    %28 = math.sqrt %27 : vector<64x64xf32>
    %29 = arith.mulf %27, %28 : vector<64x64xf32>
    %cst_12 = arith.constant -3.000000e+00 : f32
    %30 = vector.broadcast %cst_12 : f32 to vector<64x64xf32>
    %31 = arith.mulf %30, %29 : vector<64x64xf32>
    %cst_13 = arith.constant 2.000000e+00 : f32
    %32 = vector.broadcast %cst_13 : f32 to vector<64x64xf32>
    %33 = arith.mulf %32, %9 : vector<64x64xf32>
    %c0_14 = arith.constant 0 : index
    %c0_15 = arith.constant 0 : index
    %34 = vector.load %arg4[%c0_14, %c0_15] : memref<64x1xf32, #tpu.memory_space<vmem>>, vector<64x1xf32>
    %35 = vector.broadcast %34 : vector<64x1xf32> to vector<64x64xf32>
    %36 = arith.subf %33, %35 : vector<64x64xf32>
    %cst_16 = arith.constant 0xFF800000 : f32
    %37 = vector.broadcast %cst_16 : f32 to vector<64x64xf32>
    %38 = arith.select %14, %37, %36 : vector<64x64xi1>, vector<64x64xf32>
    %cst_17 = arith.constant dense<0xFF800000> : vector<64xf32>
    %39 = vector.multi_reduction <maximumf>, %38, %cst_17 [0] : vector<64x64xf32> to vector<64xf32>
    %40 = vector.shape_cast %39 : vector<64xf32> to vector<1x64xf32>
    %41 = vector.broadcast %40 : vector<1x64xf32> to vector<64x64xf32>
    %42 = arith.cmpf oeq, %38, %41 : vector<64x64xf32>
    %cst_18 = arith.constant 0.000000e+00 : f32
    %43 = vector.broadcast %cst_18 : f32 to vector<64x64xf32>
    %44 = arith.select %42, %31, %43 : vector<64x64xi1>, vector<64x64xf32>
    %cst_19 = arith.constant dense<0.000000e+00> : vector<64xf32>
    %45 = vector.multi_reduction <add>, %44, %cst_19 [0] : vector<64x64xf32> to vector<64xf32>
    %46 = vector.shape_cast %45 : vector<64xf32> to vector<1x64xf32>
    %cst_20 = arith.constant 0xFF800000 : f32
    %47 = vector.broadcast %cst_20 : f32 to vector<64x64xf32>
    %48 = arith.select %42, %47, %38 : vector<64x64xi1>, vector<64x64xf32>
    %cst_21 = arith.constant dense<0xFF800000> : vector<64xf32>
    %49 = vector.multi_reduction <maximumf>, %48, %cst_21 [0] : vector<64x64xf32> to vector<64xf32>
    %50 = vector.shape_cast %49 : vector<64xf32> to vector<1x64xf32>
    %51 = vector.broadcast %50 : vector<1x64xf32> to vector<64x64xf32>
    %52 = arith.cmpf oeq, %48, %51 : vector<64x64xf32>
    %cst_22 = arith.constant 0.000000e+00 : f32
    %53 = vector.broadcast %cst_22 : f32 to vector<64x64xf32>
    %54 = arith.select %52, %31, %53 : vector<64x64xi1>, vector<64x64xf32>
    %cst_23 = arith.constant dense<0.000000e+00> : vector<64xf32>
    %55 = vector.multi_reduction <add>, %54, %cst_23 [0] : vector<64x64xf32> to vector<64xf32>
    %56 = vector.shape_cast %55 : vector<64xf32> to vector<1x64xf32>
    %cst_24 = arith.constant 0xFF800000 : f32
    %57 = vector.broadcast %cst_24 : f32 to vector<64x64xf32>
    %58 = arith.select %52, %57, %48 : vector<64x64xi1>, vector<64x64xf32>
    %cst_25 = arith.constant dense<0xFF800000> : vector<64xf32>
    %59 = vector.multi_reduction <maximumf>, %58, %cst_25 [0] : vector<64x64xf32> to vector<64xf32>
    %60 = vector.shape_cast %59 : vector<64xf32> to vector<1x64xf32>
    %61 = vector.broadcast %60 : vector<1x64xf32> to vector<64x64xf32>
    %62 = arith.cmpf oeq, %58, %61 : vector<64x64xf32>
    %cst_26 = arith.constant 0.000000e+00 : f32
    %63 = vector.broadcast %cst_26 : f32 to vector<64x64xf32>
    %64 = arith.select %62, %31, %63 : vector<64x64xi1>, vector<64x64xf32>
    %cst_27 = arith.constant dense<0.000000e+00> : vector<64xf32>
    %65 = vector.multi_reduction <add>, %64, %cst_27 [0] : vector<64x64xf32> to vector<64xf32>
    %66 = vector.shape_cast %65 : vector<64xf32> to vector<1x64xf32>
    %cst_28 = arith.constant 0xFF800000 : f32
    %67 = vector.broadcast %cst_28 : f32 to vector<64x64xf32>
    %68 = arith.select %62, %67, %58 : vector<64x64xi1>, vector<64x64xf32>
    %cst_29 = arith.constant dense<0xFF800000> : vector<64xf32>
    %69 = vector.multi_reduction <maximumf>, %68, %cst_29 [0] : vector<64x64xf32> to vector<64xf32>
    %70 = vector.shape_cast %69 : vector<64xf32> to vector<1x64xf32>
    %71 = vector.broadcast %70 : vector<1x64xf32> to vector<64x64xf32>
    %72 = arith.cmpf oeq, %68, %71 : vector<64x64xf32>
    %cst_30 = arith.constant 0.000000e+00 : f32
    %73 = vector.broadcast %cst_30 : f32 to vector<64x64xf32>
    %74 = arith.select %72, %31, %73 : vector<64x64xi1>, vector<64x64xf32>
    %cst_31 = arith.constant dense<0.000000e+00> : vector<64xf32>
    %75 = vector.multi_reduction <add>, %74, %cst_31 [0] : vector<64x64xf32> to vector<64xf32>
    %76 = vector.shape_cast %75 : vector<64xf32> to vector<1x64xf32>
    %cst_32 = arith.constant 1.000000e+00 : f32
    %77 = vector.broadcast %cst_32 : f32 to vector<1x64xf32>
    %cst_33 = arith.constant 0.000000e+00 : f32
    %78 = vector.broadcast %cst_33 : f32 to vector<1x64xf32>
    %79 = arith.maximumf %76, %66 : vector<1x64xf32>
    %80 = arith.subf %76, %79 : vector<1x64xf32>
    %81 = math.exp %80 : vector<1x64xf32>
    %82 = arith.mulf %77, %81 : vector<1x64xf32>
    %83 = arith.subf %66, %79 : vector<1x64xf32>
    %84 = math.exp %83 : vector<1x64xf32>
    %85 = arith.addf %82, %84 : vector<1x64xf32>
    %86 = math.log %85 : vector<1x64xf32>
    %87 = arith.addf %79, %86 : vector<1x64xf32>
    %88 = arith.subf %66, %87 : vector<1x64xf32>
    %89 = arith.addf %78, %88 : vector<1x64xf32>
    %90 = arith.maximumf %79, %56 : vector<1x64xf32>
    %91 = arith.subf %79, %90 : vector<1x64xf32>
    %92 = math.exp %91 : vector<1x64xf32>
    %93 = arith.mulf %85, %92 : vector<1x64xf32>
    %94 = arith.subf %56, %90 : vector<1x64xf32>
    %95 = math.exp %94 : vector<1x64xf32>
    %96 = arith.addf %93, %95 : vector<1x64xf32>
    %97 = math.log %96 : vector<1x64xf32>
    %98 = arith.addf %90, %97 : vector<1x64xf32>
    %99 = arith.subf %56, %98 : vector<1x64xf32>
    %100 = arith.addf %89, %99 : vector<1x64xf32>
    %101 = arith.maximumf %90, %46 : vector<1x64xf32>
    %102 = arith.subf %90, %101 : vector<1x64xf32>
    %103 = math.exp %102 : vector<1x64xf32>
    %104 = arith.mulf %96, %103 : vector<1x64xf32>
    %105 = arith.subf %46, %101 : vector<1x64xf32>
    %106 = math.exp %105 : vector<1x64xf32>
    %107 = arith.addf %104, %106 : vector<1x64xf32>
    %108 = math.log %107 : vector<1x64xf32>
    %109 = arith.addf %101, %108 : vector<1x64xf32>
    %110 = arith.subf %46, %109 : vector<1x64xf32>
    %111 = arith.addf %100, %110 : vector<1x64xf32>
    %cst_34 = arith.constant 0.000000e+00 : f32
    %112 = vector.broadcast %cst_34 : f32 to vector<1x64xf32>
    %113 = arith.subf %112, %111 : vector<1x64xf32>
    %114 = vector.shape_cast %113 : vector<1x64xf32> to vector<1x64xf32>
    %115 = vector.broadcast %114 : vector<1x64xf32> to vector<8x64xf32>
    %c0_35 = arith.constant 0 : index
    %c0_36 = arith.constant 0 : index
    %116 = vector.load %arg5[%c0_35, %c0_36] : memref<8x64xf32, #tpu.memory_space<vmem>>, vector<8x64xf32>
    tpu.vector_store %arg5[%c0_35, %c0_36], %115 {strides = array<i32>} : memref<8x64xf32, #tpu.memory_space<vmem>>, vector<8x64xf32>,
    return
  }
  func.func @transform_0(%arg0: i32) -> (i32, i32) {
    %c0_i32 = arith.constant 0 : i32
    %c0_i32_0 = arith.constant 0 : i32
    %c0_i32_1 = arith.constant 0 : i32
    return %c0_i32, %c0_i32_0 : i32, i32
  }
  func.func @transform_1(%arg0: i32) -> (i32, i32) {
    %c0_i32 = arith.constant 0 : i32
    %c0_i32_0 = arith.constant 0 : i32
    %c0_i32_1 = arith.constant 0 : i32
    return %c0_i32, %c0_i32_0 : i32, i32
  }
  func.func @transform_2(%arg0: i32) -> (i32, i32) {
    %c0_i32 = arith.constant 0 : i32
    %c0_i32_0 = arith.constant 0 : i32
    %c0_i32_1 = arith.constant 0 : i32
    return %c0_i32, %c0_i32_0 : i32, i32
  }
  func.func @transform_3(%arg0: i32) -> (i32, i32) {
    %c0_i32 = arith.constant 0 : i32
    %c0_i32_0 = arith.constant 0 : i32
    %c0_i32_1 = arith.constant 0 : i32
    return %c0_i32, %c0_i32_0 : i32, i32
  }
  func.func @transform_4(%arg0: i32) -> (i32, i32) {
    %c0_i32 = arith.constant 0 : i32
    %c0_i32_0 = arith.constant 0 : i32
    return %arg0, %c0_i32 : i32, i32
  }
}

module attributes {stable_mosaic.version = 11 : i64} {
  func.func @harddarkrank_kernel(%arg0: i32, %arg1: memref<64x32xf32, #tpu.memory_space<vmem>>, %arg2: memref<64x32xf32, #tpu.memory_space<vmem>>, %arg3: memref<64x1xf32, #tpu.memory_space<vmem>>, %arg4: memref<64x1xf32, #tpu.memory_space<vmem>>, %arg5: memref<8x64xf32, #tpu.memory_space<vmem>>) attributes {dimension_semantics = [#tpu.dimension_semantics<parallel>], iteration_bounds = array<i64: 1>, scalar_prefetch = 0 : i64, scratch_operands = 0 : i64, tpu.core_type = #tpu.core_type<tc>, window_params = [{pipeline_mode = #tpu.pipeline_mode<synchronous>, transform_indices = @transform_0, window_bounds = array<i64: 64, 32>}, {pipeline_mode = #tpu.pipeline_mode<synchronous>, transform_indices = @transform_1, window_bounds = array<i64: 64, 32>}, {pipeline_mode = #tpu.pipeline_mode<synchronous>, transform_indices = @transform_2, window_bounds = array<i64: 64, 1>}, {pipeline_mode = #tpu.pipeline_mode<synchronous>, transform_indices = @transform_3, window_bounds = array<i64: 64, 1>}, {transform_indices = @transform_4, window_bounds = array<i64: 8, 64>}]} {
    %c64_i32 = arith.constant 64 : i32
    %0 = arith.muli %arg0, %c64_i32 : i32
    %1 = tpu.assume_multiple %0, 64 : i32
    %c0 = arith.constant 0 : index
    %c0_0 = arith.constant 0 : index
    %2 = vector.load %arg1[%c0, %c0_0] : memref<64x32xf32, #tpu.memory_space<vmem>>, vector<64x32xf32>
    %c0_1 = arith.constant 0 : index
    %c0_2 = arith.constant 0 : index
    %3 = vector.load %arg2[%c0_1, %c0_2] : memref<64x32xf32, #tpu.memory_space<vmem>>, vector<64x32xf32>
    %4 = arith.index_cast %1 : i32 to index
    %c0_3 = arith.constant 0 : index
    %5 = vector.load %arg1[%4, %c0_3] : memref<64x32xf32, #tpu.memory_space<vmem>>, vector<64x32xf32>
    %6 = arith.index_cast %1 : i32 to index
    %c0_4 = arith.constant 0 : index
    %7 = vector.load %arg2[%6, %c0_4] : memref<64x32xf32, #tpu.memory_space<vmem>>, vector<64x32xf32>
    %cst = arith.constant dense<0.000000e+00> : vector<64x64xf32>
    %8 = tpu.matmul %2, %5, %cst {dimension_numbers = #tpu.dot_dimension_numbers<[1], [1], [0], [0], [0, 0, 1, 0], [], []>} : vector<64x32xf32>, vector<64x32xf32>, vector<64x64xf32> -> vector<64x64xf32>
    %cst_5 = arith.constant dense<0.000000e+00> : vector<64x64xf32>
    %9 = tpu.matmul %3, %7, %cst_5 {dimension_numbers = #tpu.dot_dimension_numbers<[1], [1], [0], [0], [0, 0, 1, 0], [], []>} : vector<64x32xf32>, vector<64x32xf32>, vector<64x64xf32> -> vector<64x64xf32>
    %10 = tpu.iota {dimensions = array<i32: 0>} : vector<64x64xi32>
    %11 = tpu.iota {dimensions = array<i32: 1>} : vector<64x64xi32>
    %12 = vector.broadcast %1 : i32 to vector<64x64xi32>
    %13 = arith.addi %11, %12 : vector<64x64xi32>
    %14 = arith.cmpi eq, %10, %13 : vector<64x64xi32>
    %c0_6 = arith.constant 0 : index
    %c0_7 = arith.constant 0 : index
    %15 = vector.load %arg3[%c0_6, %c0_7] : memref<64x1xf32, #tpu.memory_space<vmem>>, vector<64x1xf32>
    %cst_8 = arith.constant 0.000000e+00 : f32
    %16 = vector.broadcast %cst_8 : f32 to vector<64x64xf32>
    %17 = arith.select %14, %8, %16 : vector<64x64xi1>, vector<64x64xf32>
    %cst_9 = arith.constant dense<0.000000e+00> : vector<64xf32>
    %18 = vector.multi_reduction <add>, %17, %cst_9 [0] : vector<64x64xf32> to vector<64xf32>
    %19 = vector.shape_cast %18 : vector<64xf32> to vector<1x64xf32>
    %20 = vector.broadcast %15 : vector<64x1xf32> to vector<64x64xf32>
    %21 = vector.broadcast %19 : vector<1x64xf32> to vector<64x64xf32>
    %22 = arith.addf %20, %21 : vector<64x64xf32>
    %cst_10 = arith.constant 2.000000e+00 : f32
    %23 = vector.broadcast %cst_10 : f32 to vector<64x64xf32>
    %24 = arith.mulf %23, %8 : vector<64x64xf32>
    %25 = arith.subf %22, %24 : vector<64x64xf32>
    %cst_11 = arith.constant 9.99999996E-13 : f32
    %26 = vector.broadcast %cst_11 : f32 to vector<64x64xf32>
    %27 = arith.maximumf %25, %26 : vector<64x64xf32>
    %28 = math.sqrt %27 : vector<64x64xf32>
    %29 = arith.mulf %27, %28 : vector<64x64xf32>
    %cst_12 = arith.constant -3.000000e+00 : f32
    %30 = vector.broadcast %cst_12 : f32 to vector<64x64xf32>
    %31 = arith.mulf %30, %29 : vector<64x64xf32>
    %cst_13 = arith.constant 2.000000e+00 : f32
    %32 = vector.broadcast %cst_13 : f32 to vector<64x64xf32>
    %33 = arith.mulf %32, %9 : vector<64x64xf32>
    %c0_14 = arith.constant 0 : index
    %c0_15 = arith.constant 0 : index
    %34 = vector.load %arg4[%c0_14, %c0_15] : memref<64x1xf32, #tpu.memory_space<vmem>>, vector<64x1xf32>
    %35 = vector.broadcast %34 : vector<64x1xf32> to vector<64x64xf32>
    %36 = arith.subf %33, %35 : vector<64x64xf32>
    %cst_16 = arith.constant 0xFF800000 : f32
    %37 = vector.broadcast %cst_16 : f32 to vector<64x64xf32>
    %38 = arith.select %14, %37, %36 : vector<64x64xi1>, vector<64x64xf32>
    %cst_17 = arith.constant dense<0xFF800000> : vector<64xf32>
    %39 = vector.multi_reduction <maximumf>, %38, %cst_17 [0] : vector<64x64xf32> to vector<64xf32>
    %40 = vector.shape_cast %39 : vector<64xf32> to vector<1x64xf32>
    %41 = vector.broadcast %40 : vector<1x64xf32> to vector<64x64xf32>
    %42 = arith.cmpf oeq, %38, %41 : vector<64x64xf32>
    %cst_18 = arith.constant 0.000000e+00 : f32
    %43 = vector.broadcast %cst_18 : f32 to vector<64x64xf32>
    %44 = arith.select %42, %31, %43 : vector<64x64xi1>, vector<64x64xf32>
    %cst_19 = arith.constant dense<0.000000e+00> : vector<64xf32>
    %45 = vector.multi_reduction <add>, %44, %cst_19 [0] : vector<64x64xf32> to vector<64xf32>
    %46 = vector.shape_cast %45 : vector<64xf32> to vector<1x64xf32>
    %cst_20 = arith.constant 0xFF800000 : f32
    %47 = vector.broadcast %cst_20 : f32 to vector<64x64xf32>
    %48 = arith.select %42, %47, %38 : vector<64x64xi1>, vector<64x64xf32>
    %cst_21 = arith.constant dense<0xFF800000> : vector<64xf32>
    %49 = vector.multi_reduction <maximumf>, %48, %cst_21 [0] : vector<64x64xf32> to vector<64xf32>
    %50 = vector.shape_cast %49 : vector<64xf32> to vector<1x64xf32>
    %51 = vector.broadcast %50 : vector<1x64xf32> to vector<64x64xf32>
    %52 = arith.cmpf oeq, %48, %51 : vector<64x64xf32>
    %cst_22 = arith.constant 0.000000e+00 : f32
    %53 = vector.broadcast %cst_22 : f32 to vector<64x64xf32>
    %54 = arith.select %52, %31, %53 : vector<64x64xi1>, vector<64x64xf32>
    %cst_23 = arith.constant dense<0.000000e+00> : vector<64xf32>
    %55 = vector.multi_reduction <add>, %54, %cst_23 [0] : vector<64x64xf32> to vector<64xf32>
    %56 = vector.shape_cast %55 : vector<64xf32> to vector<1x64xf32>
    %cst_24 = arith.constant 0xFF800000 : f32
    %57 = vector.broadcast %cst_24 : f32 to vector<64x64xf32>
    %58 = arith.select %52, %57, %48 : vector<64x64xi1>, vector<64x64xf32>
    %cst_25 = arith.constant dense<0xFF800000> : vector<64xf32>
    %59 = vector.multi_reduction <maximumf>, %58, %cst_25 [0] : vector<64x64xf32> to vector<64xf32>
    %60 = vector.shape_cast %59 : vector<64xf32> to vector<1x64xf32>
    %61 = vector.broadcast %60 : vector<1x64xf32> to vector<64x64xf32>
    %62 = arith.cmpf oeq, %58, %61 : vector<64x64xf32>
    %cst_26 = arith.constant 0.000000e+00 : f32
    %63 = vector.broadcast %cst_26 : f32 to vector<64x64xf32>
    %64 = arith.select %62, %31, %63 : vector<64x64xi1>, vector<64x64xf32>
    %cst_27 = arith.constant dense<0.000000e+00> : vector<64xf32>
    %65 = vector.multi_reduction <add>, %64, %cst_27 [0] : vector<64x64xf32> to vector<64xf32>
    %66 = vector.shape_cast %65 : vector<64xf32> to vector<1x64xf32>
    %cst_28 = arith.constant 0xFF800000 : f32
    %67 = vector.broadcast %cst_28 : f32 to vector<64x64xf32>
    %68 = arith.select %62, %67, %58 : vector<64x64xi1>, vector<64x64xf32>
    %cst_29 = arith.constant dense<0xFF800000> : vector<64xf32>
    %69 = vector.multi_reduction <maximumf>, %68, %cst_29 [0] : vector<64x64xf32> to vector<64xf32>
    %70 = vector.shape_cast %69 : vector<64xf32> to vector<1x64xf32>
    %71 = vector.broadcast %70 : vector<1x64xf32> to vector<64x64xf32>
    %72 = arith.cmpf oeq, %68, %71 : vector<64x64xf32>
    %cst_30 = arith.constant 0.000000e+00 : f32
    %73 = vector.broadcast %cst_30 : f32 to vector<64x64xf32>
    %74 = arith.select %72, %31, %73 : vector<64x64xi1>, vector<64x64xf32>
    %cst_31 = arith.constant dense<0.000000e+00> : vector<64xf32>
    %75 = vector.multi_reduction <add>, %74, %cst_31 [0] : vector<64x64xf32> to vector<64xf32>
    %76 = vector.shape_cast %75 : vector<64xf32> to vector<1x64xf32>
    %cst_32 = arith.constant 1.000000e+00 : f32
    %77 = vector.broadcast %cst_32 : f32 to vector<1x64xf32>
    %cst_33 = arith.constant 0.000000e+00 : f32
    %78 = vector.broadcast %cst_33 : f32 to vector<1x64xf32>
    %79 = arith.maximumf %76, %66 : vector<1x64xf32>
    %80 = arith.subf %76, %79 : vector<1x64xf32>
    %81 = math.exp %80 : vector<1x64xf32>
    %82 = arith.mulf %77, %81 : vector<1x64xf32>
    %83 = arith.subf %66, %79 : vector<1x64xf32>
    %84 = math.exp %83 : vector<1x64xf32>
    %85 = arith.addf %82, %84 : vector<1x64xf32>
    %86 = math.log %85 : vector<1x64xf32>
    %87 = arith.addf %79, %86 : vector<1x64xf32>
    %88 = arith.subf %66, %87 : vector<1x64xf32>
    %89 = arith.addf %78, %88 : vector<1x64xf32>
    %90 = arith.maximumf %79, %56 : vector<1x64xf32>
    %91 = arith.subf %79, %90 : vector<1x64xf32>
    %92 = math.exp %91 : vector<1x64xf32>
    %93 = arith.mulf %85, %92 : vector<1x64xf32>
    %94 = arith.subf %56, %90 : vector<1x64xf32>
    %95 = math.exp %94 : vector<1x64xf32>
    %96 = arith.addf %93, %95 : vector<1x64xf32>
    %97 = math.log %96 : vector<1x64xf32>
    %98 = arith.addf %90, %97 : vector<1x64xf32>
    %99 = arith.subf %56, %98 : vector<1x64xf32>
    %100 = arith.addf %89, %99 : vector<1x64xf32>
    %101 = arith.maximumf %90, %46 : vector<1x64xf32>
    %102 = arith.subf %90, %101 : vector<1x64xf32>
    %103 = math.exp %102 : vector<1x64xf32>
    %104 = arith.mulf %96, %103 : vector<1x64xf32>
    %105 = arith.subf %46, %101 : vector<1x64xf32>
    %106 = math.exp %105 : vector<1x64xf32>
    %107 = arith.addf %104, %106 : vector<1x64xf32>
    %108 = math.log %107 : vector<1x64xf32>
    %109 = arith.addf %101, %108 : vector<1x64xf32>
    %110 = arith.subf %46, %109 : vector<1x64xf32>
    %111 = arith.addf %100, %110 : vector<1x64xf32>
    %cst_34 = arith.constant 0.000000e+00 : f32
    %112 = vector.broadcast %cst_34 : f32 to vector<1x64xf32>
    %113 = arith.subf %112, %111 : vector<1x64xf32>
    %114 = vector.shape_cast %113 : vector<1x64xf32> to vector<1x64xf32>
    %115 = vector.broadcast %114 : vector<1x64xf32> to vector<8x64xf32>
    %c0_35 = arith.constant 0 : index
    %c0_36 = arith.constant 0 : index
    %116 = vector.load %arg5[%c0_35, %c0_36] : memref<8x64xf32, #tpu.memory_space<vmem>>, vector<8x64xf32>
    tpu.vector_store %arg5[%c0_35, %c0_36], %115 {strides = array<i32>} : memref<8x64xf32, #tpu.memory_space<vmem>>, vector<8x64xf32>,
    return
  }
  func.func @transform_0(%arg0: i32) -> (i32, i32) {
    %c0_i32 = arith.constant 0 : i32
    %c0_i32_0 = arith.constant 0 : i32
    %c0_i32_1 = arith.constant 0 : i32
    return %c0_i32, %c0_i32_0 : i32, i32
  }
  func.func @transform_1(%arg0: i32) -> (i32, i32) {
    %c0_i32 = arith.constant 0 : i32
    %c0_i32_0 = arith.constant 0 : i32
    %c0_i32_1 = arith.constant 0 : i32
    return %c0_i32, %c0_i32_0 : i32, i32
  }
  func.func @transform_2(%arg0: i32) -> (i32, i32) {
    %c0_i32 = arith.constant 0 : i32
    %c0_i32_0 = arith.constant 0 : i32
    %c0_i32_1 = arith.constant 0 : i32
    return %c0_i32, %c0_i32_0 : i32, i32
  }
  func.func @transform_3(%arg0: i32) -> (i32, i32) {
    %c0_i32 = arith.constant 0 : i32
    %c0_i32_0 = arith.constant 0 : i32
    %c0_i32_1 = arith.constant 0 : i32
    return %c0_i32, %c0_i32_0 : i32, i32
  }
  func.func @transform_4(%arg0: i32) -> (i32, i32) {
    %c0_i32 = arith.constant 0 : i32
    %c0_i32_0 = arith.constant 0 : i32
    return %arg0, %c0_i32 : i32, i32
  }
}

</mosaic_0001>

<llo_original>
// kernel: tpu_custom_call.1
$region0: #{tpu_custom_call.1}
  #allocation0 [shape = 'u32[]', space=smem, size = 0x4, offset = 0x4, fixed_abs, tag = 'smem constant byte address 0x4 - core index']
  #allocation1 [shape = 'u32[144,128]{1,0:T(1,128)}', space=vmem, size = 0x12000, scoped, tag = 'internal scratch']
  %s0 = inlined_call_operand.vmem [shape: f32[64,32], index: 0, kind: input, shape index: {}]
  %s1 = inlined_call_operand.vmem [shape: f32[64,32], index: 1, kind: input, shape index: {}]
  %s2 = inlined_call_operand.vmem [shape: f32[64,1], index: 2, kind: input, shape index: {}]
  %s3 = inlined_call_operand.vmem [shape: f32[64,1], index: 3, kind: input, shape index: {}]
  %s4 = inlined_call_operand.hbm [shape: f32[8,64], index: 4, kind: output, shape index: {}]
  %s5 = sld [smem:[#allocation0]]
  $region26: #{tpu_custom_call.1} parent=0
    _
  %s7 = ssub.s32 1, %s5
  %s8 = scalar_select 0, %s7, %s5
  $region1: #{tpu_custom_call.1} parent=0
    #allocation2 [shape = 'u8[4096]{0}', space=vmem, size = 0x1000, scoped, tag = 'output window, operand 0, single buffered']
    #allocation3 [shape = 's32[1]{0}', space=sflag, size = 0x4, scoped, tag = 'scoped memory for tpu_custom_call.1']
    %9 = vsyncpa [#allocation3], 0
    // Predicated region
    $region2: #{tpu_custom_call.1} parent=1 // pred_check
      _
    $region3: #{tpu_custom_call.1} parent=1 // pred_check_branch
      %11 = sbr.rel (0) target = $region5
    $region4: #{tpu_custom_call.1} parent=1 // pred_region
      _
    $region5: #{tpu_custom_call.1} parent=1 // pred_fallthru
      _
    // Predicated region
    $region6: #{tpu_custom_call.1} parent=1 // pred_check
      _
    $region7: #{tpu_custom_call.1} parent=1 // pred_check_branch
      %13 = sbr.rel (0) target = $region9
    $region8: #{tpu_custom_call.1} parent=1 // pred_region
      _
    $region9: #{tpu_custom_call.1} parent=1 // pred_fallthru
      _
    // Predicated region
    $region10: #{tpu_custom_call.1} parent=1 // pred_check
      _
    $region11: #{tpu_custom_call.1} parent=1 // pred_check_branch
      %15 = sbr.rel (0) target = $region13
    $region12: #{tpu_custom_call.1} parent=1 // pred_region
      _
    $region13: #{tpu_custom_call.1} parent=1 // pred_fallthru
      _
    // Predicated region
    $region14: #{tpu_custom_call.1} parent=1 // pred_check
      _
    $region15: #{tpu_custom_call.1} parent=1 // pred_check_branch
      %17 = sbr.rel (0) target = $region17
    $region16: #{tpu_custom_call.1} parent=1 // pred_region
      _
    $region17: #{tpu_custom_call.1} parent=1 // pred_fallthru
      _
    %s18 = smul.u32 0, 64
    %v19 = vld [vmem:[%s0] sm:$0xff]
    %v20 = vld [vmem:[%s0 + $0x8] sm:$0xff]
    %v21 = vld [vmem:[%s0 + $0x10] sm:$0xff]
    %v22 = vld [vmem:[%s0 + $0x18] sm:$0xff]
    %v23 = vld [vmem:[%s0 + $0x20] sm:$0xff]
    %v24 = vld [vmem:[%s0 + $0x28] sm:$0xff]
    %v25 = vld [vmem:[%s0 + $0x30] sm:$0xff]
    %v26 = vld [vmem:[%s0 + $0x38] sm:$0xff]
    %v27 = vld [vmem:[%s1] sm:$0xff]
    %v28 = vld [vmem:[%s1 + $0x8] sm:$0xff]
    %v29 = vld [vmem:[%s1 + $0x10] sm:$0xff]
    %v30 = vld [vmem:[%s1 + $0x18] sm:$0xff]
    %v31 = vld [vmem:[%s1 + $0x20] sm:$0xff]
    %v32 = vld [vmem:[%s1 + $0x28] sm:$0xff]
    %v33 = vld [vmem:[%s1 + $0x30] sm:$0xff]
    %v34 = vld [vmem:[%s1 + $0x38] sm:$0xff]
    %s35 = scalar_lea.vmem %s0, %s18
    %v36 = vld [vmem:[%s35] sm:$0xff]
    %v37 = vld [vmem:[%s35 + $0x8] sm:$0xff]
    %v38 = vld [vmem:[%s35 + $0x10] sm:$0xff]
    %v39 = vld [vmem:[%s35 + $0x18] sm:$0xff]
    %v40 = vld [vmem:[%s35 + $0x20] sm:$0xff]
    %v41 = vld [vmem:[%s35 + $0x28] sm:$0xff]
    %v42 = vld [vmem:[%s35 + $0x30] sm:$0xff]
    %v43 = vld [vmem:[%s35 + $0x38] sm:$0xff]
    %s44 = scalar_lea.vmem %s1, %s18
    %v45 = vld [vmem:[%s44] sm:$0xff]
    %v46 = vld [vmem:[%s44 + $0x8] sm:$0xff]
    %v47 = vld [vmem:[%s44 + $0x10] sm:$0xff]
    %v48 = vld [vmem:[%s44 + $0x18] sm:$0xff]
    %v49 = vld [vmem:[%s44 + $0x20] sm:$0xff]
    %v50 = vld [vmem:[%s44 + $0x28] sm:$0xff]
    %v51 = vld [vmem:[%s44 + $0x30] sm:$0xff]
    %v52 = vld [vmem:[%s44 + $0x38] sm:$0xff]
    %vm53 = vcmask 261120
    %v55 = vsel %vm53, %v19, 0
    %v58 = vsel %vm53, %v20, 0
    %v61 = vsel %vm53, %v21, 0
    %v64 = vsel %vm53, %v22, 0
    %v67 = vsel %vm53, %v23, 0
    %v70 = vsel %vm53, %v24, 0
    %v73 = vsel %vm53, %v25, 0
    %v76 = vsel %vm53, %v26, 0
    %v79 = vsel %vm53, %v36, 0
    %v82 = vsel %vm53, %v37, 0
    %v85 = vsel %vm53, %v38, 0
    %v88 = vsel %vm53, %v39, 0
    %v91 = vsel %vm53, %v40, 0
    %v94 = vsel %vm53, %v41, 0
    %v97 = vsel %vm53, %v42, 0
    %v100 = vsel %vm53, %v43, 0
    %102 = vmatprep.subr.mxu0 0.0
    %103 = vmatpush1.xpose.msra.mxu0 0.0
    %104 = vmatprep.subr.mxu0 0.0
    %105 = vmatpush1.xpose.msra.mxu0 0.0
    %106 = vmatprep.subr.mxu0 0.0
    %107 = vmatpush1.xpose.msra.mxu0 0.0
    %108 = vmatprep.subr.mxu0 0.0
    %109 = vmatpush1.xpose.msra.mxu0 0.0
    %110 = vmatprep.subr.mxu0 0.0
    %111 = vmatpush1.xpose.msra.mxu0 0.0
    %112 = vmatprep.subr.mxu0 0.0
    %113 = vmatpush1.xpose.msra.mxu0 0.0
    %114 = vmatprep.subr.mxu0 0.0
    %115 = vmatpush1.xpose.msra.mxu0 0.0
    %116 = vmatprep.subr.mxu0 0.0
    %117 = vmatpush1.xpose.msra.mxu0 0.0
    %118 = vmatprep.subr.mxu0 0.0
    %119 = vmatpush1.xpose.msra.mxu0 %v100
    %120 = vmatprep.subr.mxu0 0.0
    %121 = vmatpush1.xpose.msra.mxu0 %v97
    %122 = vmatprep.subr.mxu0 0.0
    %123 = vmatpush1.xpose.msra.mxu0 %v94
    %124 = vmatprep.subr.mxu0 0.0
    %125 = vmatpush1.xpose.msra.mxu0 %v91
    %126 = vmatprep.subr.mxu0 0.0
    %127 = vmatpush1.xpose.msra.mxu0 %v88
    %128 = vmatprep.subr.mxu0 0.0
    %129 = vmatpush1.xpose.msra.mxu0 %v85
    %130 = vmatprep.subr.mxu0 0.0
    %131 = vmatpush1.xpose.msra.mxu0 %v82
    %132 = vmatprep.subr.mxu0 0.0
    %133 = vmatpush1.xpose.msra.mxu0 %v79
    %134 = vmatprep.subr.mxu0 0.0
    %135 = vmatpush2.xpose.msra.mxu0 0.0
    %136 = vmatprep.subr.mxu0 0.0
    %137 = vmatpush2.xpose.msra.mxu0 0.0
    %138 = vmatprep.subr.mxu0 0.0
    %139 = vmatpush2.xpose.msra.mxu0 0.0
    %140 = vmatprep.subr.mxu0 0.0
    %141 = vmatpush2.xpose.msra.mxu0 0.0
    %142 = vmatprep.subr.mxu0 0.0
    %143 = vmatpush2.xpose.msra.mxu0 0.0
    %144 = vmatprep.subr.mxu0 0.0
    %145 = vmatpush2.xpose.msra.mxu0 0.0
    %146 = vmatprep.subr.mxu0 0.0
    %147 = vmatpush2.xpose.msra.mxu0 0.0
    %148 = vmatprep.subr.mxu0 0.0
    %149 = vmatpush2.xpose.msra.mxu0 0.0
    %150 = vmatprep.subr.mxu0 0.0
    %151 = vmatpush2.xpose.msra.mxu0 0.0
    %152 = vmatprep.subr.mxu0 0.0
    %153 = vmatpush2.xpose.msra.mxu0 0.0
    %154 = vmatprep.subr.mxu0 0.0
    %155 = vmatpush2.xpose.msra.mxu0 0.0
    %156 = vmatprep.subr.mxu0 0.0
    %157 = vmatpush2.xpose.msra.mxu0 0.0
    %158 = vmatprep.subr.mxu0 0.0
    %159 = vmatpush2.xpose.msra.mxu0 0.0
    %160 = vmatprep.subr.mxu0 0.0
    %161 = vmatpush2.xpose.msra.mxu0 0.0
    %162 = vmatprep.subr.mxu0 0.0
    %163 = vmatpush2.xpose.msra.mxu0 0.0
    %164 = vmatprep.subr.mxu0 0.0
    %165 = vmatpush2.xpose.msra.mxu0 0.0
    %166 = vmatprep.mubr.f32.mxu0 0.0
    %167 = vmatmul.mubr.f32.gmra.mxu0 %v55
    %v168 = vpop.f32.mrf.mxu0
    %v169 = vadd.f32 0.0, %v168
    %v170 = vpop.f32.mrf.mxu0
    %171 = vmatprep.mubr.f32.mxu0 0.0
    %172 = vmatmul.mubr.f32.gmra.mxu0 %v58
    %v173 = vpop.f32.mrf.mxu0
    %v174 = vadd.f32 0.0, %v173
    %v175 = vpop.f32.mrf.mxu0
    %176 = vmatprep.mubr.f32.mxu0 0.0
    %177 = vmatmul.mubr.f32.gmra.mxu0 %v61
    %v178 = vpop.f32.mrf.mxu0
    %v179 = vadd.f32 0.0, %v178
    %v180 = vpop.f32.mrf.mxu0
    %181 = vmatprep.mubr.f32.mxu0 0.0
    %182 = vmatmul.mubr.f32.gmra.mxu0 %v64
    %v183 = vpop.f32.mrf.mxu0
    %v184 = vadd.f32 0.0, %v183
    %v185 = vpop.f32.mrf.mxu0
    %186 = vmatprep.mubr.f32.mxu0 0.0
    %187 = vmatmul.mubr.f32.gmra.mxu0 %v67
    %v188 = vpop.f32.mrf.mxu0
    %v189 = vadd.f32 0.0, %v188
    %v190 = vpop.f32.mrf.mxu0
    %191 = vmatprep.mubr.f32.mxu0 0.0
    %192 = vmatmul.mubr.f32.gmra.mxu0 %v70
    %v193 = vpop.f32.mrf.mxu0
    %v194 = vadd.f32 0.0, %v193
    %v195 = vpop.f32.mrf.mxu0
    %196 = vmatprep.mubr.f32.mxu0 0.0
    %197 = vmatmul.mubr.f32.gmra.mxu0 %v73
    %v198 = vpop.f32.mrf.mxu0
    %v199 = vadd.f32 0.0, %v198
    %v200 = vpop.f32.mrf.mxu0
    %201 = vmatprep.mubr.f32.mxu0 0.0
    %202 = vmatmul.mubr.f32.gmra.mxu0 %v76
    %v203 = vpop.f32.mrf.mxu0
    %v204 = vadd.f32 0.0, %v203
    %v205 = vpop.f32.mrf.mxu0
    %206 = vdwg.mxu0
    %v208 = vsel %vm53, %v27, 0
    %v211 = vsel %vm53, %v28, 0
    %v214 = vsel %vm53, %v29, 0
    %v217 = vsel %vm53, %v30, 0
    %v220 = vsel %vm53, %v31, 0
    %v223 = vsel %vm53, %v32, 0
    %v226 = vsel %vm53, %v33, 0
    %v229 = vsel %vm53, %v34, 0
    %v232 = vsel %vm53, %v45, 0
    %v235 = vsel %vm53, %v46, 0
    %v238 = vsel %vm53, %v47, 0
    %v241 = vsel %vm53, %v48, 0
    %v244 = vsel %vm53, %v49, 0
    %v247 = vsel %vm53, %v50, 0
    %v250 = vsel %vm53, %v51, 0
    %v253 = vsel %vm53, %v52, 0
    %255 = vmatprep.subr.mxu0 0.0
    %256 = vmatpush1.xpose.msra.mxu0 0.0
    %257 = vmatprep.subr.mxu0 0.0
    %258 = vmatpush1.xpose.msra.mxu0 0.0
    %259 = vmatprep.subr.mxu0 0.0
    %260 = vmatpush1.xpose.msra.mxu0 0.0
    %261 = vmatprep.subr.mxu0 0.0
    %262 = vmatpush1.xpose.msra.mxu0 0.0
    %263 = vmatprep.subr.mxu0 0.0
    %264 = vmatpush1.xpose.msra.mxu0 0.0
    %265 = vmatprep.subr.mxu0 0.0
    %266 = vmatpush1.xpose.msra.mxu0 0.0
    %267 = vmatprep.subr.mxu0 0.0
    %268 = vmatpush1.xpose.msra.mxu0 0.0
    %269 = vmatprep.subr.mxu0 0.0
    %270 = vmatpush1.xpose.msra.mxu0 0.0
    %271 = vmatprep.subr.mxu0 0.0
    %272 = vmatpush1.xpose.msra.mxu0 %v253
    %273 = vmatprep.subr.mxu0 0.0
    %274 = vmatpush1.xpose.msra.mxu0 %v250
    %275 = vmatprep.subr.mxu0 0.0
    %276 = vmatpush1.xpose.msra.mxu0 %v247
    %277 = vmatprep.subr.mxu0 0.0
    %278 = vmatpush1.xpose.msra.mxu0 %v244
    %279 = vmatprep.subr.mxu0 0.0
    %280 = vmatpush1.xpose.msra.mxu0 %v241
    %281 = vmatprep.subr.mxu0 0.0
    %282 = vmatpush1.xpose.msra.mxu0 %v238
    %283 = vmatprep.subr.mxu0 0.0
    %284 = vmatpush1.xpose.msra.mxu0 %v235
    %285 = vmatprep.subr.mxu0 0.0
    %286 = vmatpush1.xpose.msra.mxu0 %v232
    %287 = vmatprep.subr.mxu0 0.0
    %288 = vmatpush2.xpose.msra.mxu0 0.0
    %289 = vmatprep.subr.mxu0 0.0
    %290 = vmatpush2.xpose.msra.mxu0 0.0
    %291 = vmatprep.subr.mxu0 0.0
    %292 = vmatpush2.xpose.msra.mxu0 0.0
    %293 = vmatprep.subr.mxu0 0.0
    %294 = vmatpush2.xpose.msra.mxu0 0.0
    %295 = vmatprep.subr.mxu0 0.0
    %296 = vmatpush2.xpose.msra.mxu0 0.0
    %297 = vmatprep.subr.mxu0 0.0
    %298 = vmatpush2.xpose.msra.mxu0 0.0
    %299 = vmatprep.subr.mxu0 0.0
    %300 = vmatpush2.xpose.msra.mxu0 0.0
    %301 = vmatprep.subr.mxu0 0.0
    %302 = vmatpush2.xpose.msra.mxu0 0.0
    %303 = vmatprep.subr.mxu0 0.0
    %304 = vmatpush2.xpose.msra.mxu0 0.0
    %305 = vmatprep.subr.mxu0 0.0
    %306 = vmatpush2.xpose.msra.mxu0 0.0
    %307 = vmatprep.subr.mxu0 0.0
    %308 = vmatpush2.xpose.msra.mxu0 0.0
    %309 = vmatprep.subr.mxu0 0.0
    %310 = vmatpush2.xpose.msra.mxu0 0.0
    %311 = vmatprep.subr.mxu0 0.0
    %312 = vmatpush2.xpose.msra.mxu0 0.0
    %313 = vmatprep.subr.mxu0 0.0
    %314 = vmatpush2.xpose.msra.mxu0 0.0
    %315 = vmatprep.subr.mxu0 0.0
    %316 = vmatpush2.xpose.msra.mxu0 0.0
    %317 = vmatprep.subr.mxu0 0.0
    %318 = vmatpush2.xpose.msra.mxu0 0.0
    %319 = vmatprep.mubr.f32.mxu0 0.0
    %320 = vmatmul.mubr.f32.gmra.mxu0 %v208
    %v321 = vpop.f32.mrf.mxu0
    %v322 = vadd.f32 0.0, %v321
    %v323 = vpop.f32.mrf.mxu0
    %324 = vmatprep.mubr.f32.mxu0 0.0
    %325 = vmatmul.mubr.f32.gmra.mxu0 %v211
    %v326 = vpop.f32.mrf.mxu0
    %v327 = vadd.f32 0.0, %v326
    %v328 = vpop.f32.mrf.mxu0
    %329 = vmatprep.mubr.f32.mxu0 0.0
    %330 = vmatmul.mubr.f32.gmra.mxu0 %v214
    %v331 = vpop.f32.mrf.mxu0
    %v332 = vadd.f32 0.0, %v331
    %v333 = vpop.f32.mrf.mxu0
    %334 = vmatprep.mubr.f32.mxu0 0.0
    %335 = vmatmul.mubr.f32.gmra.mxu0 %v217
    %v336 = vpop.f32.mrf.mxu0
    %v337 = vadd.f32 0.0, %v336
    %v338 = vpop.f32.mrf.mxu0
    %339 = vmatprep.mubr.f32.mxu0 0.0
    %340 = vmatmul.mubr.f32.gmra.mxu0 %v220
    %v341 = vpop.f32.mrf.mxu0
    %v342 = vadd.f32 0.0, %v341
    %v343 = vpop.f32.mrf.mxu0
    %344 = vmatprep.mubr.f32.mxu0 0.0
    %345 = vmatmul.mubr.f32.gmra.mxu0 %v223
    %v346 = vpop.f32.mrf.mxu0
    %v347 = vadd.f32 0.0, %v346
    %v348 = vpop.f32.mrf.mxu0
    %349 = vmatprep.mubr.f32.mxu0 0.0
    %350 = vmatmul.mubr.f32.gmra.mxu0 %v226
    %v351 = vpop.f32.mrf.mxu0
    %v352 = vadd.f32 0.0, %v351
    %v353 = vpop.f32.mrf.mxu0
    %354 = vmatprep.mubr.f32.mxu0 0.0
    %355 = vmatmul.mubr.f32.gmra.mxu0 %v229
    %v356 = vpop.f32.mrf.mxu0
    %v357 = vadd.f32 0.0, %v356
    %v358 = vpop.f32.mrf.mxu0
    %359 = vdwg.mxu0
    %v360 = vlaneseq
    %v361 = vshrl.u32 %v360, 7
    %v362 = vadd.s32 %v361, 8
    %v363 = vadd.s32 %v361, 16
    %v364 = vadd.s32 %v361, 24
    %v365 = vadd.s32 %v361, 32
    %v366 = vadd.s32 %v361, 40
    %v367 = vadd.s32 %v361, 48
    %v368 = vadd.s32 %v361, 56
    %v369 = vlaneseq
    %v370 = vand.u32 %v369, 127
    %v371 = vstv %s18
    %v372 = vadd.s32 %v370, %v371
    %vm373 = vcmp.eq.s32.totalorder %v361, %v372
    %vm374 = vcmp.eq.s32.totalorder %v362, %v372
    %vm375 = vcmp.eq.s32.totalorder %v363, %v372
    %vm376 = vcmp.eq.s32.totalorder %v364, %v372
    %vm377 = vcmp.eq.s32.totalorder %v365, %v372
    %vm378 = vcmp.eq.s32.totalorder %v366, %v372
    %vm379 = vcmp.eq.s32.totalorder %v367, %v372
    %vm380 = vcmp.eq.s32.totalorder %v368, %v372
    %v381 = vld [vmem:[%s2] sm:$0xff]
    %v382 = vld [vmem:[%s2 + $0x8] sm:$0xff]
    %v383 = vld [vmem:[%s2 + $0x10] sm:$0xff]
    %v384 = vld [vmem:[%s2 + $0x18] sm:$0xff]
    %v385 = vld [vmem:[%s2 + $0x20] sm:$0xff]
    %v386 = vld [vmem:[%s2 + $0x28] sm:$0xff]
    %v387 = vld [vmem:[%s2 + $0x30] sm:$0xff]
    %v388 = vld [vmem:[%s2 + $0x38] sm:$0xff]
    %v389 = vsel %vm373, %v169, 0.0
    %v390 = vsel %vm374, %v174, 0.0
    %v391 = vsel %vm375, %v179, 0.0
    %v392 = vsel %vm376, %v184, 0.0
    %v393 = vsel %vm377, %v189, 0.0
    %v394 = vsel %vm378, %v194, 0.0
    %v395 = vsel %vm379, %v199, 0.0
    %v396 = vsel %vm380, %v204, 0.0
    %vm397 = vcmask 523264
    %v398 = vsel %vm397, %v389, 0.0
    %v399 = vsel %vm397, %v390, 0.0
    %v400 = vadd.f32 %v398, %v399
    %v401 = vsel %vm397, %v391, 0.0
    %v402 = vadd.f32 %v400, %v401
    %v403 = vsel %vm397, %v392, 0.0
    %v404 = vadd.f32 %v402, %v403
    %v405 = vsel %vm397, %v393, 0.0
    %v406 = vadd.f32 %v404, %v405
    %v407 = vsel %vm397, %v394, 0.0
    %v408 = vadd.f32 %v406, %v407
    %v409 = vsel %vm397, %v395, 0.0
    %v410 = vadd.f32 %v408, %v409
    %v411 = vsel %vm397, %v396, 0.0
    %v412 = vadd.f32 %v410, %v411
    %v413 = vrot.slane %v412, 4
    %v414 = vadd.f32 %v412, %v413
    %v415 = vrot.slane %v414, 2
    %v416 = vadd.f32 %v414, %v415
    %v417 = vrot.slane %v416, 1
    %v418 = vadd.f32 %v416, %v417
    %420 = vset.pattern.permute.xlu0 0
    %421 = vperm.xlu0 %420, %v381
    %v422 = vpop.permute.xlu0 %421
    %425 = vset.pattern.permute.xlu0 0
    %426 = vperm.xlu0 %425, %v382
    %v427 = vpop.permute.xlu0 %426
    %430 = vset.pattern.permute.xlu0 0
    %431 = vperm.xlu0 %430, %v383
    %v432 = vpop.permute.xlu0 %431
    %435 = vset.pattern.permute.xlu0 0
    %436 = vperm.xlu0 %435, %v384
    %v437 = vpop.permute.xlu0 %436
    %440 = vset.pattern.permute.xlu0 0
    %441 = vperm.xlu0 %440, %v385
    %v442 = vpop.permute.xlu0 %441
    %445 = vset.pattern.permute.xlu0 0
    %446 = vperm.xlu0 %445, %v386
    %v447 = vpop.permute.xlu0 %446
    %450 = vset.pattern.permute.xlu0 0
    %451 = vperm.xlu0 %450, %v387
    %v452 = vpop.permute.xlu0 %451
    %455 = vset.pattern.permute.xlu0 0
    %456 = vperm.xlu0 %455, %v388
    %v457 = vpop.permute.xlu0 %456
    %v459 = vadd.f32 %v422, %v418
    %v460 = vadd.f32 %v427, %v418
    %v461 = vadd.f32 %v432, %v418
    %v462 = vadd.f32 %v437, %v418
    %v463 = vadd.f32 %v442, %v418
    %v464 = vadd.f32 %v447, %v418
    %v465 = vadd.f32 %v452, %v418
    %v466 = vadd.f32 %v457, %v418
    %v467 = vmul.f32 %v169, 2.0
    %v468 = vmul.f32 %v174, 2.0
    %v469 = vmul.f32 %v179, 2.0
    %v470 = vmul.f32 %v184, 2.0
    %v471 = vmul.f32 %v189, 2.0
    %v472 = vmul.f32 %v194, 2.0
    %v473 = vmul.f32 %v199, 2.0
    %v474 = vmul.f32 %v204, 2.0
    %v475 = vsub.f32 %v459, %v467
    %v476 = vsub.f32 %v460, %v468
    %v477 = vsub.f32 %v461, %v469
    %v478 = vsub.f32 %v462, %v470
    %v479 = vsub.f32 %v463, %v471
    %v480 = vsub.f32 %v464, %v472
    %v481 = vsub.f32 %v465, %v473
    %v482 = vsub.f32 %v466, %v474
    %v483 = vmax.f32 %v475, 1e-12
    %v484 = vmax.f32 %v476, 1e-12
    %v485 = vmax.f32 %v477, 1e-12
    %v486 = vmax.f32 %v478, 1e-12
    %v487 = vmax.f32 %v479, 1e-12
    %v488 = vmax.f32 %v480, 1e-12
    %v489 = vmax.f32 %v481, 1e-12
    %v490 = vmax.f32 %v482, 1e-12
    %v491 = vrsqrt.pop %v483
    %v492 = vmul.f32 %v483, %v491
    %vm493 = vcmp.eq.f32.partialorder %v483, inf
    %v494 = vsel %vm493, %v483, %v492
    %vm495 = vcmp.eq.f32.partialorder %v483, 0.0
    %v496 = vand.u32 %v483, 2147483648
    %v497 = vsel %vm495, %v496, %v494
    %v498 = vrsqrt.pop %v484
    %v499 = vmul.f32 %v484, %v498
    %vm500 = vcmp.eq.f32.partialorder %v484, inf
    %v501 = vsel %vm500, %v484, %v499
    %vm502 = vcmp.eq.f32.partialorder %v484, 0.0
    %v503 = vand.u32 %v484, 2147483648
    %v504 = vsel %vm502, %v503, %v501
    %v505 = vrsqrt.pop %v485
    %v506 = vmul.f32 %v485, %v505
    %vm507 = vcmp.eq.f32.partialorder %v485, inf
    %v508 = vsel %vm507, %v485, %v506
    %vm509 = vcmp.eq.f32.partialorder %v485, 0.0
    %v510 = vand.u32 %v485, 2147483648
    %v511 = vsel %vm509, %v510, %v508
    %v512 = vrsqrt.pop %v486
    %v513 = vmul.f32 %v486, %v512
    %vm514 = vcmp.eq.f32.partialorder %v486, inf
    %v515 = vsel %vm514, %v486, %v513
    %vm516 = vcmp.eq.f32.partialorder %v486, 0.0
    %v517 = vand.u32 %v486, 2147483648
    %v518 = vsel %vm516, %v517, %v515
    %v519 = vrsqrt.pop %v487
    %v520 = vmul.f32 %v487, %v519
    %vm521 = vcmp.eq.f32.partialorder %v487, inf
    %v522 = vsel %vm521, %v487, %v520
    %vm523 = vcmp.eq.f32.partialorder %v487, 0.0
    %v524 = vand.u32 %v487, 2147483648
    %v525 = vsel %vm523, %v524, %v522
    %v526 = vrsqrt.pop %v488
    %v527 = vmul.f32 %v488, %v526
    %vm528 = vcmp.eq.f32.partialorder %v488, inf
    %v529 = vsel %vm528, %v488, %v527
    %vm530 = vcmp.eq.f32.partialorder %v488, 0.0
    %v531 = vand.u32 %v488, 2147483648
    %v532 = vsel %vm530, %v531, %v529
    %v533 = vrsqrt.pop %v489
    %v534 = vmul.f32 %v489, %v533
    %vm535 = vcmp.eq.f32.partialorder %v489, inf
    %v536 = vsel %vm535, %v489, %v534
    %vm537 = vcmp.eq.f32.partialorder %v489, 0.0
    %v538 = vand.u32 %v489, 2147483648
    %v539 = vsel %vm537, %v538, %v536
    %v540 = vrsqrt.pop %v490
    %v541 = vmul.f32 %v490, %v540
    %vm542 = vcmp.eq.f32.partialorder %v490, inf
    %v543 = vsel %vm542, %v490, %v541
    %vm544 = vcmp.eq.f32.partialorder %v490, 0.0
    %v545 = vand.u32 %v490, 2147483648
    %v546 = vsel %vm544, %v545, %v543
    %v547 = vmul.f32 %v483, %v497
    %v548 = vmul.f32 %v484, %v504
    %v549 = vmul.f32 %v485, %v511
    %v550 = vmul.f32 %v486, %v518
    %v551 = vmul.f32 %v487, %v525
    %v552 = vmul.f32 %v488, %v532
    %v553 = vmul.f32 %v489, %v539
    %v554 = vmul.f32 %v490, %v546
    %v555 = vmul.f32 %v547, -3.0
    %v556 = vmul.f32 %v548, -3.0
    %v557 = vmul.f32 %v549, -3.0
    %v558 = vmul.f32 %v550, -3.0
    %v559 = vmul.f32 %v551, -3.0
    %v560 = vmul.f32 %v552, -3.0
    %v561 = vmul.f32 %v553, -3.0
    %v562 = vmul.f32 %v554, -3.0
    %v563 = vmul.f32 %v322, 2.0
    %v564 = vmul.f32 %v327, 2.0
    %v565 = vmul.f32 %v332, 2.0
    %v566 = vmul.f32 %v337, 2.0
    %v567 = vmul.f32 %v342, 2.0
    %v568 = vmul.f32 %v347, 2.0
    %v569 = vmul.f32 %v352, 2.0
    %v570 = vmul.f32 %v357, 2.0
    %v571 = vld [vmem:[%s3] sm:$0xff]
    %v572 = vld [vmem:[%s3 + $0x8] sm:$0xff]
    %v573 = vld [vmem:[%s3 + $0x10] sm:$0xff]
    %v574 = vld [vmem:[%s3 + $0x18] sm:$0xff]
    %v575 = vld [vmem:[%s3 + $0x20] sm:$0xff]
    %v576 = vld [vmem:[%s3 + $0x28] sm:$0xff]
    %v577 = vld [vmem:[%s3 + $0x30] sm:$0xff]
    %v578 = vld [vmem:[%s3 + $0x38] sm:$0xff]
    %580 = vset.pattern.permute.xlu0 0
    %581 = vperm.xlu0 %580, %v571
    %v582 = vpop.permute.xlu0 %581
    %585 = vset.pattern.permute.xlu0 0
    %586 = vperm.xlu0 %585, %v572
    %v587 = vpop.permute.xlu0 %586
    %590 = vset.pattern.permute.xlu0 0
    %591 = vperm.xlu0 %590, %v573
    %v592 = vpop.permute.xlu0 %591
    %595 = vset.pattern.permute.xlu0 0
    %596 = vperm.xlu0 %595, %v574
    %v597 = vpop.permute.xlu0 %596
    %600 = vset.pattern.permute.xlu0 0
    %601 = vperm.xlu0 %600, %v575
    %v602 = vpop.permute.xlu0 %601
    %605 = vset.pattern.permute.xlu0 0
    %606 = vperm.xlu0 %605, %v576
    %v607 = vpop.permute.xlu0 %606
    %610 = vset.pattern.permute.xlu0 0
    %611 = vperm.xlu0 %610, %v577
    %v612 = vpop.permute.xlu0 %611
    %615 = vset.pattern.permute.xlu0 0
    %616 = vperm.xlu0 %615, %v578
    %v617 = vpop.permute.xlu0 %616
    %v619 = vsub.f32 %v563, %v582
    %v620 = vsub.f32 %v564, %v587
    %v621 = vsub.f32 %v565, %v592
    %v622 = vsub.f32 %v566, %v597
    %v623 = vsub.f32 %v567, %v602
    %v624 = vsub.f32 %v568, %v607
    %v625 = vsub.f32 %v569, %v612
    %v626 = vsub.f32 %v570, %v617
    %v627 = vsel %vm373, -inf, %v619
    %v628 = vsel %vm374, -inf, %v620
    %v629 = vsel %vm375, -inf, %v621
    %v630 = vsel %vm376, -inf, %v622
    %v631 = vsel %vm377, -inf, %v623
    %v632 = vsel %vm378, -inf, %v624
    %v633 = vsel %vm379, -inf, %v625
    %v634 = vsel %vm380, -inf, %v626
    %v635 = vsel %vm397, %v627, -inf
    %v636 = vsel %vm397, %v628, -inf
    %v637 = vsel %vm397, %v629, -inf
    %v638 = vsel %vm397, %v630, -inf
    %v639 = vsel %vm397, %v631, -inf
    %v640 = vmax.f32 %v635, %v639
    %v641 = vsel %vm397, %v632, -inf
    %v642 = vmax.f32 %v636, %v641
    %v643 = vsel %vm397, %v633, -inf
    %v644 = vmax.f32 %v637, %v643
    %v645 = vsel %vm397, %v634, -inf
    %v646 = vmax.f32 %v638, %v645
    %v647 = vmax.f32 %v640, %v642
    %v648 = vmax.f32 %v644, %v646
    %v649 = vmax.f32 %v647, %v648
    %v650 = vrot.slane %v649, 4
    %v651 = vmax.f32 %v649, %v650
    %v652 = vrot.slane %v651, 2
    %v653 = vmax.f32 %v651, %v652
    %v654 = vrot.slane %v653, 1
    %v655 = vmax.f32 %v653, %v654
    %vm656 = vcmp.eq.f32.partialorder %v627, %v655
    %vm657 = vcmp.eq.f32.partialorder %v628, %v655
    %vm658 = vcmp.eq.f32.partialorder %v629, %v655
    %vm659 = vcmp.eq.f32.partialorder %v630, %v655
    %vm660 = vcmp.eq.f32.partialorder %v631, %v655
    %vm661 = vcmp.eq.f32.partialorder %v632, %v655
    %vm662 = vcmp.eq.f32.partialorder %v633, %v655
    %vm663 = vcmp.eq.f32.partialorder %v634, %v655
    %v664 = vsel %vm656, %v555, 0.0
    %v665 = vsel %vm657, %v556, 0.0
    %v666 = vsel %vm658, %v557, 0.0
    %v667 = vsel %vm659, %v558, 0.0
    %v668 = vsel %vm660, %v559, 0.0
    %v669 = vsel %vm661, %v560, 0.0
    %v670 = vsel %vm662, %v561, 0.0
    %v671 = vsel %vm663, %v562, 0.0
    %v672 = vsel %vm397, %v664, 0.0
    %v673 = vsel %vm397, %v665, 0.0
    %v674 = vadd.f32 %v672, %v673
    %v675 = vsel %vm397, %v666, 0.0
    %v676 = vadd.f32 %v674, %v675
    %v677 = vsel %vm397, %v667, 0.0
    %v678 = vadd.f32 %v676, %v677
    %v679 = vsel %vm397, %v668, 0.0
    %v680 = vadd.f32 %v678, %v679
    %v681 = vsel %vm397, %v669, 0.0
    %v682 = vadd.f32 %v680, %v681
    %v683 = vsel %vm397, %v670, 0.0
    %v684 = vadd.f32 %v682, %v683
    %v685 = vsel %vm397, %v671, 0.0
    %v686 = vadd.f32 %v684, %v685
    %v687 = vrot.slane %v686, 4
    %v688 = vadd.f32 %v686, %v687
    %v689 = vrot.slane %v688, 2
    %v690 = vadd.f32 %v688, %v689
    %v691 = vrot.slane %v690, 1
    %v692 = vadd.f32 %v690, %v691
    %v693 = vsel %vm656, -inf, %v627
    %v694 = vsel %vm657, -inf, %v628
    %v695 = vsel %vm658, -inf, %v629
    %v696 = vsel %vm659, -inf, %v630
    %v697 = vsel %vm660, -inf, %v631
    %v698 = vsel %vm661, -inf, %v632
    %v699 = vsel %vm662, -inf, %v633
    %v700 = vsel %vm663, -inf, %v634
    %v701 = vsel %vm397, %v693, -inf
    %v702 = vsel %vm397, %v694, -inf
    %v703 = vsel %vm397, %v695, -inf
    %v704 = vsel %vm397, %v696, -inf
    %v705 = vsel %vm397, %v697, -inf
    %v706 = vmax.f32 %v701, %v705
    %v707 = vsel %vm397, %v698, -inf
    %v708 = vmax.f32 %v702, %v707
    %v709 = vsel %vm397, %v699, -inf
    %v710 = vmax.f32 %v703, %v709
    %v711 = vsel %vm397, %v700, -inf
    %v712 = vmax.f32 %v704, %v711
    %v713 = vmax.f32 %v706, %v708
    %v714 = vmax.f32 %v710, %v712
    %v715 = vmax.f32 %v713, %v714
    %v716 = vrot.slane %v715, 4
    %v717 = vmax.f32 %v715, %v716
    %v718 = vrot.slane %v717, 2
    %v719 = vmax.f32 %v717, %v718
    %v720 = vrot.slane %v719, 1
    %v721 = vmax.f32 %v719, %v720
    %vm722 = vcmp.eq.f32.partialorder %v693, %v721
    %vm723 = vcmp.eq.f32.partialorder %v694, %v721
    %vm724 = vcmp.eq.f32.partialorder %v695, %v721
    %vm725 = vcmp.eq.f32.partialorder %v696, %v721
    %vm726 = vcmp.eq.f32.partialorder %v697, %v721
    %vm727 = vcmp.eq.f32.partialorder %v698, %v721
    %vm728 = vcmp.eq.f32.partialorder %v699, %v721
    %vm729 = vcmp.eq.f32.partialorder %v700, %v721
    %v730 = vsel %vm722, %v555, 0.0
    %v731 = vsel %vm723, %v556, 0.0
    %v732 = vsel %vm724, %v557, 0.0
    %v733 = vsel %vm725, %v558, 0.0
    %v734 = vsel %vm726, %v559, 0.0
    %v735 = vsel %vm727, %v560, 0.0
    %v736 = vsel %vm728, %v561, 0.0
    %v737 = vsel %vm729, %v562, 0.0
    %v738 = vsel %vm397, %v730, 0.0
    %v739 = vsel %vm397, %v731, 0.0
    %v740 = vadd.f32 %v738, %v739
    %v741 = vsel %vm397, %v732, 0.0
    %v742 = vadd.f32 %v740, %v741
    %v743 = vsel %vm397, %v733, 0.0
    %v744 = vadd.f32 %v742, %v743
    %v745 = vsel %vm397, %v734, 0.0
    %v746 = vadd.f32 %v744, %v745
    %v747 = vsel %vm397, %v735, 0.0
    %v748 = vadd.f32 %v746, %v747
    %v749 = vsel %vm397, %v736, 0.0
    %v750 = vadd.f32 %v748, %v749
    %v751 = vsel %vm397, %v737, 0.0
    %v752 = vadd.f32 %v750, %v751
    %v753 = vrot.slane %v752, 4
    %v754 = vadd.f32 %v752, %v753
    %v755 = vrot.slane %v754, 2
    %v756 = vadd.f32 %v754, %v755
    %v757 = vrot.slane %v756, 1
    %v758 = vadd.f32 %v756, %v757
    %v759 = vsel %vm722, -inf, %v693
    %v760 = vsel %vm723, -inf, %v694
    %v761 = vsel %vm724, -inf, %v695
    %v762 = vsel %vm725, -inf, %v696
    %v763 = vsel %vm726, -inf, %v697
    %v764 = vsel %vm727, -inf, %v698
    %v765 = vsel %vm728, -inf, %v699
    %v766 = vsel %vm729, -inf, %v700
    %v767 = vsel %vm397, %v759, -inf
    %v768 = vsel %vm397, %v760, -inf
    %v769 = vsel %vm397, %v761, -inf
    %v770 = vsel %vm397, %v762, -inf
    %v771 = vsel %vm397, %v763, -inf
    %v772 = vmax.f32 %v767, %v771
    %v773 = vsel %vm397, %v764, -inf
    %v774 = vmax.f32 %v768, %v773
    %v775 = vsel %vm397, %v765, -inf
    %v776 = vmax.f32 %v769, %v775
    %v777 = vsel %vm397, %v766, -inf
    %v778 = vmax.f32 %v770, %v777
    %v779 = vmax.f32 %v772, %v774
    %v780 = vmax.f32 %v776, %v778
    %v781 = vmax.f32 %v779, %v780
    %v782 = vrot.slane %v781, 4
    %v783 = vmax.f32 %v781, %v782
    %v784 = vrot.slane %v783, 2
    %v785 = vmax.f32 %v783, %v784
    %v786 = vrot.slane %v785, 1
    %v787 = vmax.f32 %v785, %v786
    %vm788 = vcmp.eq.f32.partialorder %v759, %v787
    %vm789 = vcmp.eq.f32.partialorder %v760, %v787
    %vm790 = vcmp.eq.f32.partialorder %v761, %v787
    %vm791 = vcmp.eq.f32.partialorder %v762, %v787
    %vm792 = vcmp.eq.f32.partialorder %v763, %v787
    %vm793 = vcmp.eq.f32.partialorder %v764, %v787
    %vm794 = vcmp.eq.f32.partialorder %v765, %v787
    %vm795 = vcmp.eq.f32.partialorder %v766, %v787
    %v796 = vsel %vm788, %v555, 0.0
    %v797 = vsel %vm789, %v556, 0.0
    %v798 = vsel %vm790, %v557, 0.0
    %v799 = vsel %vm791, %v558, 0.0
    %v800 = vsel %vm792, %v559, 0.0
    %v801 = vsel %vm793, %v560, 0.0
    %v802 = vsel %vm794, %v561, 0.0
    %v803 = vsel %vm795, %v562, 0.0
    %v804 = vsel %vm397, %v796, 0.0
    %v805 = vsel %vm397, %v797, 0.0
    %v806 = vadd.f32 %v804, %v805
    %v807 = vsel %vm397, %v798, 0.0
    %v808 = vadd.f32 %v806, %v807
    %v809 = vsel %vm397, %v799, 0.0
    %v810 = vadd.f32 %v808, %v809
    %v811 = vsel %vm397, %v800, 0.0
    %v812 = vadd.f32 %v810, %v811
    %v813 = vsel %vm397, %v801, 0.0
    %v814 = vadd.f32 %v812, %v813
    %v815 = vsel %vm397, %v802, 0.0
    %v816 = vadd.f32 %v814, %v815
    %v817 = vsel %vm397, %v803, 0.0
    %v818 = vadd.f32 %v816, %v817
    %v819 = vrot.slane %v818, 4
    %v820 = vadd.f32 %v818, %v819
    %v821 = vrot.slane %v820, 2
    %v822 = vadd.f32 %v820, %v821
    %v823 = vrot.slane %v822, 1
    %v824 = vadd.f32 %v822, %v823
    %v825 = vsel %vm788, -inf, %v759
    %v826 = vsel %vm789, -inf, %v760
    %v827 = vsel %vm790, -inf, %v761
    %v828 = vsel %vm791, -inf, %v762
    %v829 = vsel %vm792, -inf, %v763
    %v830 = vsel %vm793, -inf, %v764
    %v831 = vsel %vm794, -inf, %v765
    %v832 = vsel %vm795, -inf, %v766
    %v833 = vsel %vm397, %v825, -inf
    %v834 = vsel %vm397, %v826, -inf
    %v835 = vsel %vm397, %v827, -inf
    %v836 = vsel %vm397, %v828, -inf
    %v837 = vsel %vm397, %v829, -inf
    %v838 = vmax.f32 %v833, %v837
    %v839 = vsel %vm397, %v830, -inf
    %v840 = vmax.f32 %v834, %v839
    %v841 = vsel %vm397, %v831, -inf
    %v842 = vmax.f32 %v835, %v841
    %v843 = vsel %vm397, %v832, -inf
    %v844 = vmax.f32 %v836, %v843
    %v845 = vmax.f32 %v838, %v840
    %v846 = vmax.f32 %v842, %v844
    %v847 = vmax.f32 %v845, %v846
    %v848 = vrot.slane %v847, 4
    %v849 = vmax.f32 %v847, %v848
    %v850 = vrot.slane %v849, 2
    %v851 = vmax.f32 %v849, %v850
    %v852 = vrot.slane %v851, 1
    %v853 = vmax.f32 %v851, %v852
    %vm854 = vcmp.eq.f32.partialorder %v825, %v853
    %vm855 = vcmp.eq.f32.partialorder %v826, %v853
    %vm856 = vcmp.eq.f32.partialorder %v827, %v853
    %vm857 = vcmp.eq.f32.partialorder %v828, %v853
    %vm858 = vcmp.eq.f32.partialorder %v829, %v853
    %vm859 = vcmp.eq.f32.partialorder %v830, %v853
    %vm860 = vcmp.eq.f32.partialorder %v831, %v853
    %vm861 = vcmp.eq.f32.partialorder %v832, %v853
    %v862 = vsel %vm854, %v555, 0.0
    %v863 = vsel %vm855, %v556, 0.0
    %v864 = vsel %vm856, %v557, 0.0
    %v865 = vsel %vm857, %v558, 0.0
    %v866 = vsel %vm858, %v559, 0.0
    %v867 = vsel %vm859, %v560, 0.0
    %v868 = vsel %vm860, %v561, 0.0
    %v869 = vsel %vm861, %v562, 0.0
    %v870 = vsel %vm397, %v862, 0.0
    %v871 = vsel %vm397, %v863, 0.0
    %v872 = vadd.f32 %v870, %v871
    %v873 = vsel %vm397, %v864, 0.0
    %v874 = vadd.f32 %v872, %v873
    %v875 = vsel %vm397, %v865, 0.0
    %v876 = vadd.f32 %v874, %v875
    %v877 = vsel %vm397, %v866, 0.0
    %v878 = vadd.f32 %v876, %v877
    %v879 = vsel %vm397, %v867, 0.0
    %v880 = vadd.f32 %v878, %v879
    %v881 = vsel %vm397, %v868, 0.0
    %v882 = vadd.f32 %v880, %v881
    %v883 = vsel %vm397, %v869, 0.0
    %v884 = vadd.f32 %v882, %v883
    %v885 = vrot.slane %v884, 4
    %v886 = vadd.f32 %v884, %v885
    %v887 = vrot.slane %v886, 2
    %v888 = vadd.f32 %v886, %v887
    %v889 = vrot.slane %v888, 1
    %v890 = vadd.f32 %v888, %v889
    %v891 = vmax.f32 %v890, %v824
    %v892 = vsub.f32 %v890, %v891
    %v893 = vmul.f32 %v892, 1.442695
    %v894 = vpow.pop %v893
    %v895 = vsub.f32 %v824, %v891
    %v896 = vmul.f32 %v895, 1.442695
    %v897 = vpow.pop %v896
    %v898 = vadd.f32 %v894, %v897
    %v899 = vlog2.pop %v898
    %v900 = vmul.f32 %v899, 0.6931472
    %v901 = vadd.f32 %v891, %v900
    %v902 = vsub.f32 %v824, %v901
    %v903 = vadd.f32 %v902, 0.0
    %v904 = vmax.f32 %v891, %v758
    %v905 = vsub.f32 %v891, %v904
    %v906 = vmul.f32 %v905, 1.442695
    %v907 = vpow.pop %v906
    %v908 = vmul.f32 %v898, %v907
    %v909 = vsub.f32 %v758, %v904
    %v910 = vmul.f32 %v909, 1.442695
    %v911 = vpow.pop %v910
    %v912 = vadd.f32 %v908, %v911
    %v913 = vlog2.pop %v912
    %v914 = vmul.f32 %v913, 0.6931472
    %v915 = vadd.f32 %v904, %v914
    %v916 = vsub.f32 %v758, %v915
    %v917 = vadd.f32 %v903, %v916
    %v918 = vmax.f32 %v904, %v692
    %v919 = vsub.f32 %v904, %v918
    %v920 = vmul.f32 %v919, 1.442695
    %v921 = vpow.pop %v920
    %v922 = vmul.f32 %v912, %v921
    %v923 = vsub.f32 %v692, %v918
    %v924 = vmul.f32 %v923, 1.442695
    %v925 = vpow.pop %v924
    %v926 = vadd.f32 %v922, %v925
    %v927 = vlog2.pop %v926
    %v928 = vmul.f32 %v927, 0.6931472
    %v929 = vadd.f32 %v918, %v928
    %v930 = vsub.f32 %v692, %v929
    %v931 = vadd.f32 %v917, %v930
    %v932 = vsub.f32 0.0, %v931
    %933 = vst.msk [vmem:[#allocation2] sm:$0xff] %vm397, %v932
    // Predicated region
    $region18: #{tpu_custom_call.1} parent=1 // pred_check
      _
    $region19: #{tpu_custom_call.1} parent=1 // pred_check_branch
      %935 = sbr.rel (0) target = $region21
    $region20: #{tpu_custom_call.1} parent=1 // pred_region
      %s937 = ssub.s32 128, 128
      %938 = vsyncadd [#allocation3], %s937
      %s940 = sshll.u32 [#allocation2], 4
      %s941 = int_to_ptr.vmem [resolvable:$true] %s940
      %943 = dma.vmem_to_hbm [thread:$0]  %s941, 128, %s4, [#allocation3]
    $region21: #{tpu_custom_call.1} parent=1 // pred_fallthru
      _
    // Predicated region
    $region22: #{tpu_custom_call.1} parent=1 // pred_check
      _
    $region23: #{tpu_custom_call.1} parent=1 // pred_check_branch
      %945 = sbr.rel (0) target = $region25
    $region24: #{tpu_custom_call.1} parent=1 // pred_region
      %946 = dma.done [#allocation3], 128
    $region25: #{tpu_custom_call.1} parent=1 // pred_fallthru
      _
    %947 = vsyncpa [#allocation3], 1

// kernel: tpu_custom_call.1
$region0: #{tpu_custom_call.1}
  #allocation0 [shape = 'u32[]', space=smem, size = 0x4, offset = 0x4, fixed_abs, tag = 'smem constant byte address 0x4 - core index']
  #allocation1 [shape = 'u32[144,128]{1,0:T(1,128)}', space=vmem, size = 0x12000, scoped, tag = 'internal scratch']
  %s0 = inlined_call_operand.vmem [shape: f32[64,32], index: 0, kind: input, shape index: {}]
  %s1 = inlined_call_operand.vmem [shape: f32[64,32], index: 1, kind: input, shape index: {}]
  %s2 = inlined_call_operand.vmem [shape: f32[64,1], index: 2, kind: input, shape index: {}]
  %s3 = inlined_call_operand.vmem [shape: f32[64,1], index: 3, kind: input, shape index: {}]
  %s4 = inlined_call_operand.hbm [shape: f32[8,64], index: 4, kind: output, shape index: {}]
  %s5 = sld [smem:[#allocation0]]
  $region26: #{tpu_custom_call.1} parent=0
    _
  %s7 = ssub.s32 1, %s5
  %s8 = scalar_select 0, %s7, %s5
  $region1: #{tpu_custom_call.1} parent=0
    #allocation2 [shape = 'u8[4096]{0}', space=vmem, size = 0x1000, scoped, tag = 'output window, operand 0, single buffered']
    #allocation3 [shape = 's32[1]{0}', space=sflag, size = 0x4, scoped, tag = 'scoped memory for tpu_custom_call.1']
    %9 = vsyncpa [#allocation3], 0
    // Predicated region
    $region2: #{tpu_custom_call.1} parent=1 // pred_check
      _
    $region3: #{tpu_custom_call.1} parent=1 // pred_check_branch
      %11 = sbr.rel (0) target = $region5
    $region4: #{tpu_custom_call.1} parent=1 // pred_region
      _
    $region5: #{tpu_custom_call.1} parent=1 // pred_fallthru
      _
    // Predicated region
    $region6: #{tpu_custom_call.1} parent=1 // pred_check
      _
    $region7: #{tpu_custom_call.1} parent=1 // pred_check_branch
      %13 = sbr.rel (0) target = $region9
    $region8: #{tpu_custom_call.1} parent=1 // pred_region
      _
    $region9: #{tpu_custom_call.1} parent=1 // pred_fallthru
      _
    // Predicated region
    $region10: #{tpu_custom_call.1} parent=1 // pred_check
      _
    $region11: #{tpu_custom_call.1} parent=1 // pred_check_branch
      %15 = sbr.rel (0) target = $region13
    $region12: #{tpu_custom_call.1} parent=1 // pred_region
      _
    $region13: #{tpu_custom_call.1} parent=1 // pred_fallthru
      _
    // Predicated region
    $region14: #{tpu_custom_call.1} parent=1 // pred_check
      _
    $region15: #{tpu_custom_call.1} parent=1 // pred_check_branch
      %17 = sbr.rel (0) target = $region17
    $region16: #{tpu_custom_call.1} parent=1 // pred_region
      _
    $region17: #{tpu_custom_call.1} parent=1 // pred_fallthru
      _
    %s18 = smul.u32 0, 64
    %v19 = vld [vmem:[%s0] sm:$0xff]
    %v20 = vld [vmem:[%s0 + $0x8] sm:$0xff]
    %v21 = vld [vmem:[%s0 + $0x10] sm:$0xff]
    %v22 = vld [vmem:[%s0 + $0x18] sm:$0xff]
    %v23 = vld [vmem:[%s0 + $0x20] sm:$0xff]
    %v24 = vld [vmem:[%s0 + $0x28] sm:$0xff]
    %v25 = vld [vmem:[%s0 + $0x30] sm:$0xff]
    %v26 = vld [vmem:[%s0 + $0x38] sm:$0xff]
    %v27 = vld [vmem:[%s1] sm:$0xff]
    %v28 = vld [vmem:[%s1 + $0x8] sm:$0xff]
    %v29 = vld [vmem:[%s1 + $0x10] sm:$0xff]
    %v30 = vld [vmem:[%s1 + $0x18] sm:$0xff]
    %v31 = vld [vmem:[%s1 + $0x20] sm:$0xff]
    %v32 = vld [vmem:[%s1 + $0x28] sm:$0xff]
    %v33 = vld [vmem:[%s1 + $0x30] sm:$0xff]
    %v34 = vld [vmem:[%s1 + $0x38] sm:$0xff]
    %s35 = scalar_lea.vmem %s0, %s18
    %v36 = vld [vmem:[%s35] sm:$0xff]
    %v37 = vld [vmem:[%s35 + $0x8] sm:$0xff]
    %v38 = vld [vmem:[%s35 + $0x10] sm:$0xff]
    %v39 = vld [vmem:[%s35 + $0x18] sm:$0xff]
    %v40 = vld [vmem:[%s35 + $0x20] sm:$0xff]
    %v41 = vld [vmem:[%s35 + $0x28] sm:$0xff]
    %v42 = vld [vmem:[%s35 + $0x30] sm:$0xff]
    %v43 = vld [vmem:[%s35 + $0x38] sm:$0xff]
    %s44 = scalar_lea.vmem %s1, %s18
    %v45 = vld [vmem:[%s44] sm:$0xff]
    %v46 = vld [vmem:[%s44 + $0x8] sm:$0xff]
    %v47 = vld [vmem:[%s44 + $0x10] sm:$0xff]
    %v48 = vld [vmem:[%s44 + $0x18] sm:$0xff]
    %v49 = vld [vmem:[%s44 + $0x20] sm:$0xff]
    %v50 = vld [vmem:[%s44 + $0x28] sm:$0xff]
    %v51 = vld [vmem:[%s44 + $0x30] sm:$0xff]
    %v52 = vld [vmem:[%s44 + $0x38] sm:$0xff]
    %vm53 = vcmask 261120
    %v55 = vsel %vm53, %v19, 0
    %v58 = vsel %vm53, %v20, 0
    %v61 = vsel %vm53, %v21, 0
    %v64 = vsel %vm53, %v22, 0
    %v67 = vsel %vm53, %v23, 0
    %v70 = vsel %vm53, %v24, 0
    %v73 = vsel %vm53, %v25, 0
    %v76 = vsel %vm53, %v26, 0
    %v79 = vsel %vm53, %v36, 0
    %v82 = vsel %vm53, %v37, 0
    %v85 = vsel %vm53, %v38, 0
    %v88 = vsel %vm53, %v39, 0
    %v91 = vsel %vm53, %v40, 0
    %v94 = vsel %vm53, %v41, 0
    %v97 = vsel %vm53, %v42, 0
    %v100 = vsel %vm53, %v43, 0
    %102 = vmatprep.subr.mxu0 0.0
    %103 = vmatpush1.xpose.msra.mxu0 0.0
    %104 = vmatprep.subr.mxu0 0.0
    %105 = vmatpush1.xpose.msra.mxu0 0.0
    %106 = vmatprep.subr.mxu0 0.0
    %107 = vmatpush1.xpose.msra.mxu0 0.0
    %108 = vmatprep.subr.mxu0 0.0
    %109 = vmatpush1.xpose.msra.mxu0 0.0
    %110 = vmatprep.subr.mxu0 0.0
    %111 = vmatpush1.xpose.msra.mxu0 0.0
    %112 = vmatprep.subr.mxu0 0.0
    %113 = vmatpush1.xpose.msra.mxu0 0.0
    %114 = vmatprep.subr.mxu0 0.0
    %115 = vmatpush1.xpose.msra.mxu0 0.0
    %116 = vmatprep.subr.mxu0 0.0
    %117 = vmatpush1.xpose.msra.mxu0 0.0
    %118 = vmatprep.subr.mxu0 0.0
    %119 = vmatpush1.xpose.msra.mxu0 %v100
    %120 = vmatprep.subr.mxu0 0.0
    %121 = vmatpush1.xpose.msra.mxu0 %v97
    %122 = vmatprep.subr.mxu0 0.0
    %123 = vmatpush1.xpose.msra.mxu0 %v94
    %124 = vmatprep.subr.mxu0 0.0
    %125 = vmatpush1.xpose.msra.mxu0 %v91
    %126 = vmatprep.subr.mxu0 0.0
    %127 = vmatpush1.xpose.msra.mxu0 %v88
    %128 = vmatprep.subr.mxu0 0.0
    %129 = vmatpush1.xpose.msra.mxu0 %v85
    %130 = vmatprep.subr.mxu0 0.0
    %131 = vmatpush1.xpose.msra.mxu0 %v82
    %132 = vmatprep.subr.mxu0 0.0
    %133 = vmatpush1.xpose.msra.mxu0 %v79
    %134 = vmatprep.subr.mxu0 0.0
    %135 = vmatpush2.xpose.msra.mxu0 0.0
    %136 = vmatprep.subr.mxu0 0.0
    %137 = vmatpush2.xpose.msra.mxu0 0.0
    %138 = vmatprep.subr.mxu0 0.0
    %139 = vmatpush2.xpose.msra.mxu0 0.0
    %140 = vmatprep.subr.mxu0 0.0
    %141 = vmatpush2.xpose.msra.mxu0 0.0
    %142 = vmatprep.subr.mxu0 0.0
    %143 = vmatpush2.xpose.msra.mxu0 0.0
    %144 = vmatprep.subr.mxu0 0.0
    %145 = vmatpush2.xpose.msra.mxu0 0.0
    %146 = vmatprep.subr.mxu0 0.0
    %147 = vmatpush2.xpose.msra.mxu0 0.0
    %148 = vmatprep.subr.mxu0 0.0
    %149 = vmatpush2.xpose.msra.mxu0 0.0
    %150 = vmatprep.subr.mxu0 0.0
    %151 = vmatpush2.xpose.msra.mxu0 0.0
    %152 = vmatprep.subr.mxu0 0.0
    %153 = vmatpush2.xpose.msra.mxu0 0.0
    %154 = vmatprep.subr.mxu0 0.0
    %155 = vmatpush2.xpose.msra.mxu0 0.0
    %156 = vmatprep.subr.mxu0 0.0
    %157 = vmatpush2.xpose.msra.mxu0 0.0
    %158 = vmatprep.subr.mxu0 0.0
    %159 = vmatpush2.xpose.msra.mxu0 0.0
    %160 = vmatprep.subr.mxu0 0.0
    %161 = vmatpush2.xpose.msra.mxu0 0.0
    %162 = vmatprep.subr.mxu0 0.0
    %163 = vmatpush2.xpose.msra.mxu0 0.0
    %164 = vmatprep.subr.mxu0 0.0
    %165 = vmatpush2.xpose.msra.mxu0 0.0
    %166 = vmatprep.mubr.f32.mxu0 0.0
    %167 = vmatmul.mubr.f32.gmra.mxu0 %v55
    %v168 = vpop.f32.mrf.mxu0
    %v169 = vadd.f32 0.0, %v168
    %v170 = vpop.f32.mrf.mxu0
    %171 = vmatprep.mubr.f32.mxu0 0.0
    %172 = vmatmul.mubr.f32.gmra.mxu0 %v58
    %v173 = vpop.f32.mrf.mxu0
    %v174 = vadd.f32 0.0, %v173
    %v175 = vpop.f32.mrf.mxu0
    %176 = vmatprep.mubr.f32.mxu0 0.0
    %177 = vmatmul.mubr.f32.gmra.mxu0 %v61
    %v178 = vpop.f32.mrf.mxu0
    %v179 = vadd.f32 0.0, %v178
    %v180 = vpop.f32.mrf.mxu0
    %181 = vmatprep.mubr.f32.mxu0 0.0
    %182 = vmatmul.mubr.f32.gmra.mxu0 %v64
    %v183 = vpop.f32.mrf.mxu0
    %v184 = vadd.f32 0.0, %v183
    %v185 = vpop.f32.mrf.mxu0
    %186 = vmatprep.mubr.f32.mxu0 0.0
    %187 = vmatmul.mubr.f32.gmra.mxu0 %v67
    %v188 = vpop.f32.mrf.mxu0
    %v189 = vadd.f32 0.0, %v188
    %v190 = vpop.f32.mrf.mxu0
    %191 = vmatprep.mubr.f32.mxu0 0.0
    %192 = vmatmul.mubr.f32.gmra.mxu0 %v70
    %v193 = vpop.f32.mrf.mxu0
    %v194 = vadd.f32 0.0, %v193
    %v195 = vpop.f32.mrf.mxu0
    %196 = vmatprep.mubr.f32.mxu0 0.0
    %197 = vmatmul.mubr.f32.gmra.mxu0 %v73
    %v198 = vpop.f32.mrf.mxu0
    %v199 = vadd.f32 0.0, %v198
    %v200 = vpop.f32.mrf.mxu0
    %201 = vmatprep.mubr.f32.mxu0 0.0
    %202 = vmatmul.mubr.f32.gmra.mxu0 %v76
    %v203 = vpop.f32.mrf.mxu0
    %v204 = vadd.f32 0.0, %v203
    %v205 = vpop.f32.mrf.mxu0
    %206 = vdwg.mxu0
    %v208 = vsel %vm53, %v27, 0
    %v211 = vsel %vm53, %v28, 0
    %v214 = vsel %vm53, %v29, 0
    %v217 = vsel %vm53, %v30, 0
    %v220 = vsel %vm53, %v31, 0
    %v223 = vsel %vm53, %v32, 0
    %v226 = vsel %vm53, %v33, 0
    %v229 = vsel %vm53, %v34, 0
    %v232 = vsel %vm53, %v45, 0
    %v235 = vsel %vm53, %v46, 0
    %v238 = vsel %vm53, %v47, 0
    %v241 = vsel %vm53, %v48, 0
    %v244 = vsel %vm53, %v49, 0
    %v247 = vsel %vm53, %v50, 0
    %v250 = vsel %vm53, %v51, 0
    %v253 = vsel %vm53, %v52, 0
    %255 = vmatprep.subr.mxu0 0.0
    %256 = vmatpush1.xpose.msra.mxu0 0.0
    %257 = vmatprep.subr.mxu0 0.0
    %258 = vmatpush1.xpose.msra.mxu0 0.0
    %259 = vmatprep.subr.mxu0 0.0
    %260 = vmatpush1.xpose.msra.mxu0 0.0
    %261 = vmatprep.subr.mxu0 0.0
    %262 = vmatpush1.xpose.msra.mxu0 0.0
    %263 = vmatprep.subr.mxu0 0.0
    %264 = vmatpush1.xpose.msra.mxu0 0.0
    %265 = vmatprep.subr.mxu0 0.0
    %266 = vmatpush1.xpose.msra.mxu0 0.0
    %267 = vmatprep.subr.mxu0 0.0
    %268 = vmatpush1.xpose.msra.mxu0 0.0
    %269 = vmatprep.subr.mxu0 0.0
    %270 = vmatpush1.xpose.msra.mxu0 0.0
    %271 = vmatprep.subr.mxu0 0.0
    %272 = vmatpush1.xpose.msra.mxu0 %v253
    %273 = vmatprep.subr.mxu0 0.0
    %274 = vmatpush1.xpose.msra.mxu0 %v250
    %275 = vmatprep.subr.mxu0 0.0
    %276 = vmatpush1.xpose.msra.mxu0 %v247
    %277 = vmatprep.subr.mxu0 0.0
    %278 = vmatpush1.xpose.msra.mxu0 %v244
    %279 = vmatprep.subr.mxu0 0.0
    %280 = vmatpush1.xpose.msra.mxu0 %v241
    %281 = vmatprep.subr.mxu0 0.0
    %282 = vmatpush1.xpose.msra.mxu0 %v238
    %283 = vmatprep.subr.mxu0 0.0
    %284 = vmatpush1.xpose.msra.mxu0 %v235
    %285 = vmatprep.subr.mxu0 0.0
    %286 = vmatpush1.xpose.msra.mxu0 %v232
    %287 = vmatprep.subr.mxu0 0.0
    %288 = vmatpush2.xpose.msra.mxu0 0.0
    %289 = vmatprep.subr.mxu0 0.0
    %290 = vmatpush2.xpose.msra.mxu0 0.0
    %291 = vmatprep.subr.mxu0 0.0
    %292 = vmatpush2.xpose.msra.mxu0 0.0
    %293 = vmatprep.subr.mxu0 0.0
    %294 = vmatpush2.xpose.msra.mxu0 0.0
    %295 = vmatprep.subr.mxu0 0.0
    %296 = vmatpush2.xpose.msra.mxu0 0.0
    %297 = vmatprep.subr.mxu0 0.0
    %298 = vmatpush2.xpose.msra.mxu0 0.0
    %299 = vmatprep.subr.mxu0 0.0
    %300 = vmatpush2.xpose.msra.mxu0 0.0
    %301 = vmatprep.subr.mxu0 0.0
    %302 = vmatpush2.xpose.msra.mxu0 0.0
    %303 = vmatprep.subr.mxu0 0.0
    %304 = vmatpush2.xpose.msra.mxu0 0.0
    %305 = vmatprep.subr.mxu0 0.0
    %306 = vmatpush2.xpose.msra.mxu0 0.0
    %307 = vmatprep.subr.mxu0 0.0
    %308 = vmatpush2.xpose.msra.mxu0 0.0
    %309 = vmatprep.subr.mxu0 0.0
    %310 = vmatpush2.xpose.msra.mxu0 0.0
    %311 = vmatprep.subr.mxu0 0.0
    %312 = vmatpush2.xpose.msra.mxu0 0.0
    %313 = vmatprep.subr.mxu0 0.0
    %314 = vmatpush2.xpose.msra.mxu0 0.0
    %315 = vmatprep.subr.mxu0 0.0
    %316 = vmatpush2.xpose.msra.mxu0 0.0
    %317 = vmatprep.subr.mxu0 0.0
    %318 = vmatpush2.xpose.msra.mxu0 0.0
    %319 = vmatprep.mubr.f32.mxu0 0.0
    %320 = vmatmul.mubr.f32.gmra.mxu0 %v208
    %v321 = vpop.f32.mrf.mxu0
    %v322 = vadd.f32 0.0, %v321
    %v323 = vpop.f32.mrf.mxu0
    %324 = vmatprep.mubr.f32.mxu0 0.0
    %325 = vmatmul.mubr.f32.gmra.mxu0 %v211
    %v326 = vpop.f32.mrf.mxu0
    %v327 = vadd.f32 0.0, %v326
    %v328 = vpop.f32.mrf.mxu0
    %329 = vmatprep.mubr.f32.mxu0 0.0
    %330 = vmatmul.mubr.f32.gmra.mxu0 %v214
    %v331 = vpop.f32.mrf.mxu0
    %v332 = vadd.f32 0.0, %v331
    %v333 = vpop.f32.mrf.mxu0
    %334 = vmatprep.mubr.f32.mxu0 0.0
    %335 = vmatmul.mubr.f32.gmra.mxu0 %v217
    %v336 = vpop.f32.mrf.mxu0
    %v337 = vadd.f32 0.0, %v336
    %v338 = vpop.f32.mrf.mxu0
    %339 = vmatprep.mubr.f32.mxu0 0.0
    %340 = vmatmul.mubr.f32.gmra.mxu0 %v220
    %v341 = vpop.f32.mrf.mxu0
    %v342 = vadd.f32 0.0, %v341
    %v343 = vpop.f32.mrf.mxu0
    %344 = vmatprep.mubr.f32.mxu0 0.0
    %345 = vmatmul.mubr.f32.gmra.mxu0 %v223
    %v346 = vpop.f32.mrf.mxu0
    %v347 = vadd.f32 0.0, %v346
    %v348 = vpop.f32.mrf.mxu0
    %349 = vmatprep.mubr.f32.mxu0 0.0
    %350 = vmatmul.mubr.f32.gmra.mxu0 %v226
    %v351 = vpop.f32.mrf.mxu0
    %v352 = vadd.f32 0.0, %v351
    %v353 = vpop.f32.mrf.mxu0
    %354 = vmatprep.mubr.f32.mxu0 0.0
    %355 = vmatmul.mubr.f32.gmra.mxu0 %v229
    %v356 = vpop.f32.mrf.mxu0
    %v357 = vadd.f32 0.0, %v356
    %v358 = vpop.f32.mrf.mxu0
    %359 = vdwg.mxu0
    %v360 = vlaneseq
    %v361 = vshrl.u32 %v360, 7
    %v362 = vadd.s32 %v361, 8
    %v363 = vadd.s32 %v361, 16
    %v364 = vadd.s32 %v361, 24
    %v365 = vadd.s32 %v361, 32
    %v366 = vadd.s32 %v361, 40
    %v367 = vadd.s32 %v361, 48
    %v368 = vadd.s32 %v361, 56
    %v369 = vlaneseq
    %v370 = vand.u32 %v369, 127
    %v371 = vstv %s18
    %v372 = vadd.s32 %v370, %v371
    %vm373 = vcmp.eq.s32.totalorder %v361, %v372
    %vm374 = vcmp.eq.s32.totalorder %v362, %v372
    %vm375 = vcmp.eq.s32.totalorder %v363, %v372
    %vm376 = vcmp.eq.s32.totalorder %v364, %v372
    %vm377 = vcmp.eq.s32.totalorder %v365, %v372
    %vm378 = vcmp.eq.s32.totalorder %v366, %v372
    %vm379 = vcmp.eq.s32.totalorder %v367, %v372
    %vm380 = vcmp.eq.s32.totalorder %v368, %v372
    %v381 = vld [vmem:[%s2] sm:$0xff]
    %v382 = vld [vmem:[%s2 + $0x8] sm:$0xff]
    %v383 = vld [vmem:[%s2 + $0x10] sm:$0xff]
    %v384 = vld [vmem:[%s2 + $0x18] sm:$0xff]
    %v385 = vld [vmem:[%s2 + $0x20] sm:$0xff]
    %v386 = vld [vmem:[%s2 + $0x28] sm:$0xff]
    %v387 = vld [vmem:[%s2 + $0x30] sm:$0xff]
    %v388 = vld [vmem:[%s2 + $0x38] sm:$0xff]
    %v389 = vsel %vm373, %v169, 0.0
    %v390 = vsel %vm374, %v174, 0.0
    %v391 = vsel %vm375, %v179, 0.0
    %v392 = vsel %vm376, %v184, 0.0
    %v393 = vsel %vm377, %v189, 0.0
    %v394 = vsel %vm378, %v194, 0.0
    %v395 = vsel %vm379, %v199, 0.0
    %v396 = vsel %vm380, %v204, 0.0
    %vm397 = vcmask 523264
    %v398 = vsel %vm397, %v389, 0.0
    %v399 = vsel %vm397, %v390, 0.0
    %v400 = vadd.f32 %v398, %v399
    %v401 = vsel %vm397, %v391, 0.0
    %v402 = vadd.f32 %v400, %v401
    %v403 = vsel %vm397, %v392, 0.0
    %v404 = vadd.f32 %v402, %v403
    %v405 = vsel %vm397, %v393, 0.0
    %v406 = vadd.f32 %v404, %v405
    %v407 = vsel %vm397, %v394, 0.0
    %v408 = vadd.f32 %v406, %v407
    %v409 = vsel %vm397, %v395, 0.0
    %v410 = vadd.f32 %v408, %v409
    %v411 = vsel %vm397, %v396, 0.0
    %v412 = vadd.f32 %v410, %v411
    %v413 = vrot.slane %v412, 4
    %v414 = vadd.f32 %v412, %v413
    %v415 = vrot.slane %v414, 2
    %v416 = vadd.f32 %v414, %v415
    %v417 = vrot.slane %v416, 1
    %v418 = vadd.f32 %v416, %v417
    %420 = vset.pattern.permute.xlu0 0
    %421 = vperm.xlu0 %420, %v381
    %v422 = vpop.permute.xlu0 %421
    %425 = vset.pattern.permute.xlu0 0
    %426 = vperm.xlu0 %425, %v382
    %v427 = vpop.permute.xlu0 %426
    %430 = vset.pattern.permute.xlu0 0
    %431 = vperm.xlu0 %430, %v383
    %v432 = vpop.permute.xlu0 %431
    %435 = vset.pattern.permute.xlu0 0
    %436 = vperm.xlu0 %435, %v384
    %v437 = vpop.permute.xlu0 %436
    %440 = vset.pattern.permute.xlu0 0
    %441 = vperm.xlu0 %440, %v385
    %v442 = vpop.permute.xlu0 %441
    %445 = vset.pattern.permute.xlu0 0
    %446 = vperm.xlu0 %445, %v386
    %v447 = vpop.permute.xlu0 %446
    %450 = vset.pattern.permute.xlu0 0
    %451 = vperm.xlu0 %450, %v387
    %v452 = vpop.permute.xlu0 %451
    %455 = vset.pattern.permute.xlu0 0
    %456 = vperm.xlu0 %455, %v388
    %v457 = vpop.permute.xlu0 %456
    %v459 = vadd.f32 %v422, %v418
    %v460 = vadd.f32 %v427, %v418
    %v461 = vadd.f32 %v432, %v418
    %v462 = vadd.f32 %v437, %v418
    %v463 = vadd.f32 %v442, %v418
    %v464 = vadd.f32 %v447, %v418
    %v465 = vadd.f32 %v452, %v418
    %v466 = vadd.f32 %v457, %v418
    %v467 = vmul.f32 %v169, 2.0
    %v468 = vmul.f32 %v174, 2.0
    %v469 = vmul.f32 %v179, 2.0
    %v470 = vmul.f32 %v184, 2.0
    %v471 = vmul.f32 %v189, 2.0
    %v472 = vmul.f32 %v194, 2.0
    %v473 = vmul.f32 %v199, 2.0
    %v474 = vmul.f32 %v204, 2.0
    %v475 = vsub.f32 %v459, %v467
    %v476 = vsub.f32 %v460, %v468
    %v477 = vsub.f32 %v461, %v469
    %v478 = vsub.f32 %v462, %v470
    %v479 = vsub.f32 %v463, %v471
    %v480 = vsub.f32 %v464, %v472
    %v481 = vsub.f32 %v465, %v473
    %v482 = vsub.f32 %v466, %v474
    %v483 = vmax.f32 %v475, 1e-12
    %v484 = vmax.f32 %v476, 1e-12
    %v485 = vmax.f32 %v477, 1e-12
    %v486 = vmax.f32 %v478, 1e-12
    %v487 = vmax.f32 %v479, 1e-12
    %v488 = vmax.f32 %v480, 1e-12
    %v489 = vmax.f32 %v481, 1e-12
    %v490 = vmax.f32 %v482, 1e-12
    %v491 = vrsqrt.pop %v483
    %v492 = vmul.f32 %v483, %v491
    %vm493 = vcmp.eq.f32.partialorder %v483, inf
    %v494 = vsel %vm493, %v483, %v492
    %vm495 = vcmp.eq.f32.partialorder %v483, 0.0
    %v496 = vand.u32 %v483, 2147483648
    %v497 = vsel %vm495, %v496, %v494
    %v498 = vrsqrt.pop %v484
    %v499 = vmul.f32 %v484, %v498
    %vm500 = vcmp.eq.f32.partialorder %v484, inf
    %v501 = vsel %vm500, %v484, %v499
    %vm502 = vcmp.eq.f32.partialorder %v484, 0.0
    %v503 = vand.u32 %v484, 2147483648
    %v504 = vsel %vm502, %v503, %v501
    %v505 = vrsqrt.pop %v485
    %v506 = vmul.f32 %v485, %v505
    %vm507 = vcmp.eq.f32.partialorder %v485, inf
    %v508 = vsel %vm507, %v485, %v506
    %vm509 = vcmp.eq.f32.partialorder %v485, 0.0
    %v510 = vand.u32 %v485, 2147483648
    %v511 = vsel %vm509, %v510, %v508
    %v512 = vrsqrt.pop %v486
    %v513 = vmul.f32 %v486, %v512
    %vm514 = vcmp.eq.f32.partialorder %v486, inf
    %v515 = vsel %vm514, %v486, %v513
    %vm516 = vcmp.eq.f32.partialorder %v486, 0.0
    %v517 = vand.u32 %v486, 2147483648
    %v518 = vsel %vm516, %v517, %v515
    %v519 = vrsqrt.pop %v487
    %v520 = vmul.f32 %v487, %v519
    %vm521 = vcmp.eq.f32.partialorder %v487, inf
    %v522 = vsel %vm521, %v487, %v520
    %vm523 = vcmp.eq.f32.partialorder %v487, 0.0
    %v524 = vand.u32 %v487, 2147483648
    %v525 = vsel %vm523, %v524, %v522
    %v526 = vrsqrt.pop %v488
    %v527 = vmul.f32 %v488, %v526
    %vm528 = vcmp.eq.f32.partialorder %v488, inf
    %v529 = vsel %vm528, %v488, %v527
    %vm530 = vcmp.eq.f32.partialorder %v488, 0.0
    %v531 = vand.u32 %v488, 2147483648
    %v532 = vsel %vm530, %v531, %v529
    %v533 = vrsqrt.pop %v489
    %v534 = vmul.f32 %v489, %v533
    %vm535 = vcmp.eq.f32.partialorder %v489, inf
    %v536 = vsel %vm535, %v489, %v534
    %vm537 = vcmp.eq.f32.partialorder %v489, 0.0
    %v538 = vand.u32 %v489, 2147483648
    %v539 = vsel %vm537, %v538, %v536
    %v540 = vrsqrt.pop %v490
    %v541 = vmul.f32 %v490, %v540
    %vm542 = vcmp.eq.f32.partialorder %v490, inf
    %v543 = vsel %vm542, %v490, %v541
    %vm544 = vcmp.eq.f32.partialorder %v490, 0.0
    %v545 = vand.u32 %v490, 2147483648
    %v546 = vsel %vm544, %v545, %v543
    %v547 = vmul.f32 %v483, %v497
    %v548 = vmul.f32 %v484, %v504
    %v549 = vmul.f32 %v485, %v511
    %v550 = vmul.f32 %v486, %v518
    %v551 = vmul.f32 %v487, %v525
    %v552 = vmul.f32 %v488, %v532
    %v553 = vmul.f32 %v489, %v539
    %v554 = vmul.f32 %v490, %v546
    %v555 = vmul.f32 %v547, -3.0
    %v556 = vmul.f32 %v548, -3.0
    %v557 = vmul.f32 %v549, -3.0
    %v558 = vmul.f32 %v550, -3.0
    %v559 = vmul.f32 %v551, -3.0
    %v560 = vmul.f32 %v552, -3.0
    %v561 = vmul.f32 %v553, -3.0
    %v562 = vmul.f32 %v554, -3.0
    %v563 = vmul.f32 %v322, 2.0
    %v564 = vmul.f32 %v327, 2.0
    %v565 = vmul.f32 %v332, 2.0
    %v566 = vmul.f32 %v337, 2.0
    %v567 = vmul.f32 %v342, 2.0
    %v568 = vmul.f32 %v347, 2.0
    %v569 = vmul.f32 %v352, 2.0
    %v570 = vmul.f32 %v357, 2.0
    %v571 = vld [vmem:[%s3] sm:$0xff]
    %v572 = vld [vmem:[%s3 + $0x8] sm:$0xff]
    %v573 = vld [vmem:[%s3 + $0x10] sm:$0xff]
    %v574 = vld [vmem:[%s3 + $0x18] sm:$0xff]
    %v575 = vld [vmem:[%s3 + $0x20] sm:$0xff]
    %v576 = vld [vmem:[%s3 + $0x28] sm:$0xff]
    %v577 = vld [vmem:[%s3 + $0x30] sm:$0xff]
    %v578 = vld [vmem:[%s3 + $0x38] sm:$0xff]
    %580 = vset.pattern.permute.xlu0 0
    %581 = vperm.xlu0 %580, %v571
    %v582 = vpop.permute.xlu0 %581
    %585 = vset.pattern.permute.xlu0 0
    %586 = vperm.xlu0 %585, %v572
    %v587 = vpop.permute.xlu0 %586
    %590 = vset.pattern.permute.xlu0 0
    %591 = vperm.xlu0 %590, %v573
    %v592 = vpop.permute.xlu0 %591
    %595 = vset.pattern.permute.xlu0 0
    %596 = vperm.xlu0 %595, %v574
    %v597 = vpop.permute.xlu0 %596
    %600 = vset.pattern.permute.xlu0 0
    %601 = vperm.xlu0 %600, %v575
    %v602 = vpop.permute.xlu0 %601
    %605 = vset.pattern.permute.xlu0 0
    %606 = vperm.xlu0 %605, %v576
    %v607 = vpop.permute.xlu0 %606
    %610 = vset.pattern.permute.xlu0 0
    %611 = vperm.xlu0 %610, %v577
    %v612 = vpop.permute.xlu0 %611
    %615 = vset.pattern.permute.xlu0 0
    %616 = vperm.xlu0 %615, %v578
    %v617 = vpop.permute.xlu0 %616
    %v619 = vsub.f32 %v563, %v582
    %v620 = vsub.f32 %v564, %v587
    %v621 = vsub.f32 %v565, %v592
    %v622 = vsub.f32 %v566, %v597
    %v623 = vsub.f32 %v567, %v602
    %v624 = vsub.f32 %v568, %v607
    %v625 = vsub.f32 %v569, %v612
    %v626 = vsub.f32 %v570, %v617
    %v627 = vsel %vm373, -inf, %v619
    %v628 = vsel %vm374, -inf, %v620
    %v629 = vsel %vm375, -inf, %v621
    %v630 = vsel %vm376, -inf, %v622
    %v631 = vsel %vm377, -inf, %v623
    %v632 = vsel %vm378, -inf, %v624
    %v633 = vsel %vm379, -inf, %v625
    %v634 = vsel %vm380, -inf, %v626
    %v635 = vsel %vm397, %v627, -inf
    %v636 = vsel %vm397, %v628, -inf
    %v637 = vsel %vm397, %v629, -inf
    %v638 = vsel %vm397, %v630, -inf
    %v639 = vsel %vm397, %v631, -inf
    %v640 = vmax.f32 %v635, %v639
    %v641 = vsel %vm397, %v632, -inf
    %v642 = vmax.f32 %v636, %v641
    %v643 = vsel %vm397, %v633, -inf
    %v644 = vmax.f32 %v637, %v643
    %v645 = vsel %vm397, %v634, -inf
    %v646 = vmax.f32 %v638, %v645
    %v647 = vmax.f32 %v640, %v642
    %v648 = vmax.f32 %v644, %v646
    %v649 = vmax.f32 %v647, %v648
    %v650 = vrot.slane %v649, 4
    %v651 = vmax.f32 %v649, %v650
    %v652 = vrot.slane %v651, 2
    %v653 = vmax.f32 %v651, %v652
    %v654 = vrot.slane %v653, 1
    %v655 = vmax.f32 %v653, %v654
    %vm656 = vcmp.eq.f32.partialorder %v627, %v655
    %vm657 = vcmp.eq.f32.partialorder %v628, %v655
    %vm658 = vcmp.eq.f32.partialorder %v629, %v655
    %vm659 = vcmp.eq.f32.partialorder %v630, %v655
    %vm660 = vcmp.eq.f32.partialorder %v631, %v655
    %vm661 = vcmp.eq.f32.partialorder %v632, %v655
    %vm662 = vcmp.eq.f32.partialorder %v633, %v655
    %vm663 = vcmp.eq.f32.partialorder %v634, %v655
    %v664 = vsel %vm656, %v555, 0.0
    %v665 = vsel %vm657, %v556, 0.0
    %v666 = vsel %vm658, %v557, 0.0
    %v667 = vsel %vm659, %v558, 0.0
    %v668 = vsel %vm660, %v559, 0.0
    %v669 = vsel %vm661, %v560, 0.0
    %v670 = vsel %vm662, %v561, 0.0
    %v671 = vsel %vm663, %v562, 0.0
    %v672 = vsel %vm397, %v664, 0.0
    %v673 = vsel %vm397, %v665, 0.0
    %v674 = vadd.f32 %v672, %v673
    %v675 = vsel %vm397, %v666, 0.0
    %v676 = vadd.f32 %v674, %v675
    %v677 = vsel %vm397, %v667, 0.0
    %v678 = vadd.f32 %v676, %v677
    %v679 = vsel %vm397, %v668, 0.0
    %v680 = vadd.f32 %v678, %v679
    %v681 = vsel %vm397, %v669, 0.0
    %v682 = vadd.f32 %v680, %v681
    %v683 = vsel %vm397, %v670, 0.0
    %v684 = vadd.f32 %v682, %v683
    %v685 = vsel %vm397, %v671, 0.0
    %v686 = vadd.f32 %v684, %v685
    %v687 = vrot.slane %v686, 4
    %v688 = vadd.f32 %v686, %v687
    %v689 = vrot.slane %v688, 2
    %v690 = vadd.f32 %v688, %v689
    %v691 = vrot.slane %v690, 1
    %v692 = vadd.f32 %v690, %v691
    %v693 = vsel %vm656, -inf, %v627
    %v694 = vsel %vm657, -inf, %v628
    %v695 = vsel %vm658, -inf, %v629
    %v696 = vsel %vm659, -inf, %v630
    %v697 = vsel %vm660, -inf, %v631
    %v698 = vsel %vm661, -inf, %v632
    %v699 = vsel %vm662, -inf, %v633
    %v700 = vsel %vm663, -inf, %v634
    %v701 = vsel %vm397, %v693, -inf
    %v702 = vsel %vm397, %v694, -inf
    %v703 = vsel %vm397, %v695, -inf
    %v704 = vsel %vm397, %v696, -inf
    %v705 = vsel %vm397, %v697, -inf
    %v706 = vmax.f32 %v701, %v705
    %v707 = vsel %vm397, %v698, -inf
    %v708 = vmax.f32 %v702, %v707
    %v709 = vsel %vm397, %v699, -inf
    %v710 = vmax.f32 %v703, %v709
    %v711 = vsel %vm397, %v700, -inf
    %v712 = vmax.f32 %v704, %v711
    %v713 = vmax.f32 %v706, %v708
    %v714 = vmax.f32 %v710, %v712
    %v715 = vmax.f32 %v713, %v714
    %v716 = vrot.slane %v715, 4
    %v717 = vmax.f32 %v715, %v716
    %v718 = vrot.slane %v717, 2
    %v719 = vmax.f32 %v717, %v718
    %v720 = vrot.slane %v719, 1
    %v721 = vmax.f32 %v719, %v720
    %vm722 = vcmp.eq.f32.partialorder %v693, %v721
    %vm723 = vcmp.eq.f32.partialorder %v694, %v721
    %vm724 = vcmp.eq.f32.partialorder %v695, %v721
    %vm725 = vcmp.eq.f32.partialorder %v696, %v721
    %vm726 = vcmp.eq.f32.partialorder %v697, %v721
    %vm727 = vcmp.eq.f32.partialorder %v698, %v721
    %vm728 = vcmp.eq.f32.partialorder %v699, %v721
    %vm729 = vcmp.eq.f32.partialorder %v700, %v721
    %v730 = vsel %vm722, %v555, 0.0
    %v731 = vsel %vm723, %v556, 0.0
    %v732 = vsel %vm724, %v557, 0.0
    %v733 = vsel %vm725, %v558, 0.0
    %v734 = vsel %vm726, %v559, 0.0
    %v735 = vsel %vm727, %v560, 0.0
    %v736 = vsel %vm728, %v561, 0.0
    %v737 = vsel %vm729, %v562, 0.0
    %v738 = vsel %vm397, %v730, 0.0
    %v739 = vsel %vm397, %v731, 0.0
    %v740 = vadd.f32 %v738, %v739
    %v741 = vsel %vm397, %v732, 0.0
    %v742 = vadd.f32 %v740, %v741
    %v743 = vsel %vm397, %v733, 0.0
    %v744 = vadd.f32 %v742, %v743
    %v745 = vsel %vm397, %v734, 0.0
    %v746 = vadd.f32 %v744, %v745
    %v747 = vsel %vm397, %v735, 0.0
    %v748 = vadd.f32 %v746, %v747
    %v749 = vsel %vm397, %v736, 0.0
    %v750 = vadd.f32 %v748, %v749
    %v751 = vsel %vm397, %v737, 0.0
    %v752 = vadd.f32 %v750, %v751
    %v753 = vrot.slane %v752, 4
    %v754 = vadd.f32 %v752, %v753
    %v755 = vrot.slane %v754, 2
    %v756 = vadd.f32 %v754, %v755
    %v757 = vrot.slane %v756, 1
    %v758 = vadd.f32 %v756, %v757
    %v759 = vsel %vm722, -inf, %v693
    %v760 = vsel %vm723, -inf, %v694
    %v761 = vsel %vm724, -inf, %v695
    %v762 = vsel %vm725, -inf, %v696
    %v763 = vsel %vm726, -inf, %v697
    %v764 = vsel %vm727, -inf, %v698
    %v765 = vsel %vm728, -inf, %v699
    %v766 = vsel %vm729, -inf, %v700
    %v767 = vsel %vm397, %v759, -inf
    %v768 = vsel %vm397, %v760, -inf
    %v769 = vsel %vm397, %v761, -inf
    %v770 = vsel %vm397, %v762, -inf
    %v771 = vsel %vm397, %v763, -inf
    %v772 = vmax.f32 %v767, %v771
    %v773 = vsel %vm397, %v764, -inf
    %v774 = vmax.f32 %v768, %v773
    %v775 = vsel %vm397, %v765, -inf
    %v776 = vmax.f32 %v769, %v775
    %v777 = vsel %vm397, %v766, -inf
    %v778 = vmax.f32 %v770, %v777
    %v779 = vmax.f32 %v772, %v774
    %v780 = vmax.f32 %v776, %v778
    %v781 = vmax.f32 %v779, %v780
    %v782 = vrot.slane %v781, 4
    %v783 = vmax.f32 %v781, %v782
    %v784 = vrot.slane %v783, 2
    %v785 = vmax.f32 %v783, %v784
    %v786 = vrot.slane %v785, 1
    %v787 = vmax.f32 %v785, %v786
    %vm788 = vcmp.eq.f32.partialorder %v759, %v787
    %vm789 = vcmp.eq.f32.partialorder %v760, %v787
    %vm790 = vcmp.eq.f32.partialorder %v761, %v787
    %vm791 = vcmp.eq.f32.partialorder %v762, %v787
    %vm792 = vcmp.eq.f32.partialorder %v763, %v787
    %vm793 = vcmp.eq.f32.partialorder %v764, %v787
    %vm794 = vcmp.eq.f32.partialorder %v765, %v787
    %vm795 = vcmp.eq.f32.partialorder %v766, %v787
    %v796 = vsel %vm788, %v555, 0.0
    %v797 = vsel %vm789, %v556, 0.0
    %v798 = vsel %vm790, %v557, 0.0
    %v799 = vsel %vm791, %v558, 0.0
    %v800 = vsel %vm792, %v559, 0.0
    %v801 = vsel %vm793, %v560, 0.0
    %v802 = vsel %vm794, %v561, 0.0
    %v803 = vsel %vm795, %v562, 0.0
    %v804 = vsel %vm397, %v796, 0.0
    %v805 = vsel %vm397, %v797, 0.0
    %v806 = vadd.f32 %v804, %v805
    %v807 = vsel %vm397, %v798, 0.0
    %v808 = vadd.f32 %v806, %v807
    %v809 = vsel %vm397, %v799, 0.0
    %v810 = vadd.f32 %v808, %v809
    %v811 = vsel %vm397, %v800, 0.0
    %v812 = vadd.f32 %v810, %v811
    %v813 = vsel %vm397, %v801, 0.0
    %v814 = vadd.f32 %v812, %v813
    %v815 = vsel %vm397, %v802, 0.0
    %v816 = vadd.f32 %v814, %v815
    %v817 = vsel %vm397, %v803, 0.0
    %v818 = vadd.f32 %v816, %v817
    %v819 = vrot.slane %v818, 4
    %v820 = vadd.f32 %v818, %v819
    %v821 = vrot.slane %v820, 2
    %v822 = vadd.f32 %v820, %v821
    %v823 = vrot.slane %v822, 1
    %v824 = vadd.f32 %v822, %v823
    %v825 = vsel %vm788, -inf, %v759
    %v826 = vsel %vm789, -inf, %v760
    %v827 = vsel %vm790, -inf, %v761
    %v828 = vsel %vm791, -inf, %v762
    %v829 = vsel %vm792, -inf, %v763
    %v830 = vsel %vm793, -inf, %v764
    %v831 = vsel %vm794, -inf, %v765
    %v832 = vsel %vm795, -inf, %v766
    %v833 = vsel %vm397, %v825, -inf
    %v834 = vsel %vm397, %v826, -inf
    %v835 = vsel %vm397, %v827, -inf
    %v836 = vsel %vm397, %v828, -inf
    %v837 = vsel %vm397, %v829, -inf
    %v838 = vmax.f32 %v833, %v837
    %v839 = vsel %vm397, %v830, -inf
    %v840 = vmax.f32 %v834, %v839
    %v841 = vsel %vm397, %v831, -inf
    %v842 = vmax.f32 %v835, %v841
    %v843 = vsel %vm397, %v832, -inf
    %v844 = vmax.f32 %v836, %v843
    %v845 = vmax.f32 %v838, %v840
    %v846 = vmax.f32 %v842, %v844
    %v847 = vmax.f32 %v845, %v846
    %v848 = vrot.slane %v847, 4
    %v849 = vmax.f32 %v847, %v848
    %v850 = vrot.slane %v849, 2
    %v851 = vmax.f32 %v849, %v850
    %v852 = vrot.slane %v851, 1
    %v853 = vmax.f32 %v851, %v852
    %vm854 = vcmp.eq.f32.partialorder %v825, %v853
    %vm855 = vcmp.eq.f32.partialorder %v826, %v853
    %vm856 = vcmp.eq.f32.partialorder %v827, %v853
    %vm857 = vcmp.eq.f32.partialorder %v828, %v853
    %vm858 = vcmp.eq.f32.partialorder %v829, %v853
    %vm859 = vcmp.eq.f32.partialorder %v830, %v853
    %vm860 = vcmp.eq.f32.partialorder %v831, %v853
    %vm861 = vcmp.eq.f32.partialorder %v832, %v853
    %v862 = vsel %vm854, %v555, 0.0
    %v863 = vsel %vm855, %v556, 0.0
    %v864 = vsel %vm856, %v557, 0.0
    %v865 = vsel %vm857, %v558, 0.0
    %v866 = vsel %vm858, %v559, 0.0
    %v867 = vsel %vm859, %v560, 0.0
    %v868 = vsel %vm860, %v561, 0.0
    %v869 = vsel %vm861, %v562, 0.0
    %v870 = vsel %vm397, %v862, 0.0
    %v871 = vsel %vm397, %v863, 0.0
    %v872 = vadd.f32 %v870, %v871
    %v873 = vsel %vm397, %v864, 0.0
    %v874 = vadd.f32 %v872, %v873
    %v875 = vsel %vm397, %v865, 0.0
    %v876 = vadd.f32 %v874, %v875
    %v877 = vsel %vm397, %v866, 0.0
    %v878 = vadd.f32 %v876, %v877
    %v879 = vsel %vm397, %v867, 0.0
    %v880 = vadd.f32 %v878, %v879
    %v881 = vsel %vm397, %v868, 0.0
    %v882 = vadd.f32 %v880, %v881
    %v883 = vsel %vm397, %v869, 0.0
    %v884 = vadd.f32 %v882, %v883
    %v885 = vrot.slane %v884, 4
    %v886 = vadd.f32 %v884, %v885
    %v887 = vrot.slane %v886, 2
    %v888 = vadd.f32 %v886, %v887
    %v889 = vrot.slane %v888, 1
    %v890 = vadd.f32 %v888, %v889
    %v891 = vmax.f32 %v890, %v824
    %v892 = vsub.f32 %v890, %v891
    %v893 = vmul.f32 %v892, 1.442695
    %v894 = vpow.pop %v893
    %v895 = vsub.f32 %v824, %v891
    %v896 = vmul.f32 %v895, 1.442695
    %v897 = vpow.pop %v896
    %v898 = vadd.f32 %v894, %v897
    %v899 = vlog2.pop %v898
    %v900 = vmul.f32 %v899, 0.6931472
    %v901 = vadd.f32 %v891, %v900
    %v902 = vsub.f32 %v824, %v901
    %v903 = vadd.f32 %v902, 0.0
    %v904 = vmax.f32 %v891, %v758
    %v905 = vsub.f32 %v891, %v904
    %v906 = vmul.f32 %v905, 1.442695
    %v907 = vpow.pop %v906
    %v908 = vmul.f32 %v898, %v907
    %v909 = vsub.f32 %v758, %v904
    %v910 = vmul.f32 %v909, 1.442695
    %v911 = vpow.pop %v910
    %v912 = vadd.f32 %v908, %v911
    %v913 = vlog2.pop %v912
    %v914 = vmul.f32 %v913, 0.6931472
    %v915 = vadd.f32 %v904, %v914
    %v916 = vsub.f32 %v758, %v915
    %v917 = vadd.f32 %v903, %v916
    %v918 = vmax.f32 %v904, %v692
    %v919 = vsub.f32 %v904, %v918
    %v920 = vmul.f32 %v919, 1.442695
    %v921 = vpow.pop %v920
    %v922 = vmul.f32 %v912, %v921
    %v923 = vsub.f32 %v692, %v918
    %v924 = vmul.f32 %v923, 1.442695
    %v925 = vpow.pop %v924
    %v926 = vadd.f32 %v922, %v925
    %v927 = vlog2.pop %v926
    %v928 = vmul.f32 %v927, 0.6931472
    %v929 = vadd.f32 %v918, %v928
    %v930 = vsub.f32 %v692, %v929
    %v931 = vadd.f32 %v917, %v930
    %v932 = vsub.f32 0.0, %v931
    %933 = vst.msk [vmem:[#allocation2] sm:$0xff] %vm397, %v932
    // Predicated region
    $region18: #{tpu_custom_call.1} parent=1 // pred_check
      _
    $region19: #{tpu_custom_call.1} parent=1 // pred_check_branch
      %935 = sbr.rel (0) target = $region21
    $region20: #{tpu_custom_call.1} parent=1 // pred_region
      %s937 = ssub.s32 128, 128
      %938 = vsyncadd [#allocation3], %s937
      %s940 = sshll.u32 [#allocation2], 4
      %s941 = int_to_ptr.vmem [resolvable:$true] %s940
      %943 = dma.vmem_to_hbm [thread:$0]  %s941, 128, %s4, [#allocation3]
    $region21: #{tpu_custom_call.1} parent=1 // pred_fallthru
      _
    // Predicated region
    $region22: #{tpu_custom_call.1} parent=1 // pred_check
      _
    $region23: #{tpu_custom_call.1} parent=1 // pred_check_branch
      %945 = sbr.rel (0) target = $region25
    $region24: #{tpu_custom_call.1} parent=1 // pred_region
      %946 = dma.done [#allocation3], 128
    $region25: #{tpu_custom_call.1} parent=1 // pred_fallthru
      _
    %947 = vsyncpa [#allocation3], 1

</llo_original>
